<compile_context>
chip_gen: v5e
topology: v5e:2x2
jax: 0.10.0
libtpu: 0.0.40
codegen_flags: <defaults>
</compile_context>

<pallas_src>
import functools

import jax
import jax.numpy as jnp
from jax import lax
from jax.experimental import pallas as pl
from jax.experimental.pallas import tpu as pltpu


def _block_kernel(x_ref, w1_ref, b1_ref, w2_ref, b2_ref, out_ref, *,
                  H, W, Cin, Cmid, Cout, K, Bt):
    f32 = jnp.float32

    def pad1_hw(v):
        # Zero-pad H and W by 1 on a VMEM-resident value (no HBM pass, no scratch).
        b, h, w, c = v.shape
        zw = jnp.zeros((b, h, 1, c), v.dtype)
        v = jnp.concatenate([zw, v, zw], axis=2)          # (b, h, w+2, c)
        zh = jnp.zeros((b, 1, w + 2, c), v.dtype)
        return jnp.concatenate([zh, v, zh], axis=1)       # (b, h+2, w+2, c)

    def conv3x3_relu(v, wf_ref, bias_ref):
        # im2col over the 9 taps -> a single big-K MXU dot per conv.
        b, h, w, c = v.shape
        vp = pad1_hw(v)
        taps = [vp[:, dy:dy + h, dx:dx + w, :]
                for dy in range(3) for dx in range(3)]
        col = jnp.concatenate(taps, axis=-1)              # (b, h, w, 9*c)
        col = col.reshape(b * h * w, 9 * c)               # lane dim unchanged
        acc = jnp.dot(col.astype(jnp.bfloat16), wf_ref[...],
                      preferred_element_type=f32)         # (b*h*w, Cc) f32
        acc = acc + bias_ref[...]                         # (1, Cc) broadcast
        return jnp.maximum(acc, 0.0)

    x = x_ref[...].astype(f32)                            # (Bt, H, W, Cin)

    mid = conv3x3_relu(x, w1_ref, b1_ref).reshape(Bt, H, W, Cmid)
    y = conv3x3_relu(mid, w2_ref, b2_ref).reshape(Bt, H, W, Cout)

    if K == 1:
        out_ref[...] = y.astype(out_ref.dtype)
        return

    Ho, Wo = H // K, W // K
    # ---- max-pool over H: split the (major) H axis, elementwise maxima ----
    y = y[:, :Ho * K].reshape(Bt, Ho, K, W, Cout)
    yh = y[:, :, 0]
    for k in range(1, K):
        yh = jnp.maximum(yh, y[:, :, k])                  # (Bt, Ho, W, Cout)
    # ---- max-pool over W: per output column, max of its K source columns ----
    cols = []
    for wo in range(Wo):
        c = yh[:, :, wo * K:wo * K + 1, :]
        for k in range(1, K):
            c = jnp.maximum(c, yh[:, :, wo * K + k:wo * K + k + 1, :])
        cols.append(c)
    pooled = jnp.concatenate(cols, axis=2)                # (Bt, Ho, Wo, Cout)
    out_ref[...] = pooled.astype(out_ref.dtype)


def _pick_batch_tile(N, H, W):
    """Fold several images into one grid step (bigger matmul M), while keeping
    >= 2 grid steps so the 'parallel' axis can shard across v7x's 2 TensorCores
    and the per-step working set stays small (v7x has 64 MiB VMEM)."""
    if N <= 1:
        return 1
    target_rows = 2048                      # ~M rows fed to each conv matmul
    bt = max(1, min(N // 2, max(1, target_rows // (H * W))))
    while N % bt:
        bt -= 1
    return bt


def block_forward(x_nchw, w1, b1, w2, b2, *, pool_k, batch_tile=None):
    """x_nchw: (N, Cin, H, W). w1: (3,3,Cin,Cmid) HWIO. w2: (3,3,Cmid,Cout) HWIO.
    (A PyTorch OIHW Conv2d weight maps to HWIO via transpose(2, 3, 1, 0).)"""
    N, Cin, H, W = x_nchw.shape
    assert w1.shape[:3] == (3, 3, Cin)
    Cmid = w1.shape[-1]
    Cout = w2.shape[-1]
    K = pool_k
    Ho, Wo = H // K, W // K

    Bt = batch_tile or _pick_batch_tile(N, H, W)
    assert N % Bt == 0, (N, Bt)

    x = jnp.transpose(x_nchw, (0, 2, 3, 1))               # NCHW -> NHWC (C on lanes)

    # im2col-folded weights (tap-major, matching the in-kernel concat order);
    # bf16 feeds the MXU natively on v5e/v6e/v7x, accumulation stays f32.
    w1f = w1.reshape(9 * Cin, Cmid).astype(jnp.bfloat16)
    w2f = w2.reshape(9 * Cmid, Cout).astype(jnp.bfloat16)
    b1r = b1.reshape(1, Cmid).astype(jnp.float32)
    b2r = b2.reshape(1, Cout).astype(jnp.float32)

    kernel = functools.partial(_block_kernel, H=H, W=W, Cin=Cin, Cmid=Cmid,
                               Cout=Cout, K=K, Bt=Bt)

    out = pl.pallas_call(
        kernel,
        out_shape=jax.ShapeDtypeStruct((N, Ho, Wo, Cout), x.dtype),
        grid_spec=pltpu.PrefetchScalarGridSpec(
            num_scalar_prefetch=0,
            grid=(N // Bt,),                               # Bt images / step
            in_specs=[
                pl.BlockSpec((Bt, H, W, Cin), lambda n: (n, 0, 0, 0)),
                pl.BlockSpec((9 * Cin, Cmid), lambda n: (0, 0)),
                pl.BlockSpec((1, Cmid), lambda n: (0, 0)),
                pl.BlockSpec((9 * Cmid, Cout), lambda n: (0, 0)),
                pl.BlockSpec((1, Cout), lambda n: (0, 0)),
            ],
            out_specs=pl.BlockSpec((Bt, Ho, Wo, Cout), lambda n: (n, 0, 0, 0)),
        ),
        compiler_params=pltpu.CompilerParams(
            dimension_semantics=("parallel",),
            vmem_limit_bytes=32 * 1024 * 1024),
    )(x, w1f, b1r, w2f, b2r)

    return jnp.transpose(out, (0, 3, 1, 2))                # NHWC -> NCHW


def _reference(x_nchw, w1, b1, w2, b2, pool_k):
    """Pure-JAX reference matching the PyTorch forward (batch_norm=False)."""
    x = jnp.transpose(x_nchw, (0, 2, 3, 1))
    dn1 = lax.conv_dimension_numbers(x.shape, w1.shape, ('NHWC', 'HWIO', 'NHWC'))
    y = lax.conv_general_dilated(x, w1, (1, 1), 'SAME', dimension_numbers=dn1) + b1
    y = jnp.maximum(y, 0.0)
    dn2 = lax.conv_dimension_numbers(y.shape, w2.shape, ('NHWC', 'HWIO', 'NHWC'))
    y = lax.conv_general_dilated(y, w2, (1, 1), 'SAME', dimension_numbers=dn2) + b2
    y = jnp.maximum(y, 0.0)
    if pool_k != 1:
        y = lax.reduce_window(y, -jnp.inf, lax.max,
                              (1, pool_k, pool_k, 1), (1, pool_k, pool_k, 1),
                              'VALID')
    return jnp.transpose(y, (0, 3, 1, 2))


if __name__ == "__main__":
    N, Cin, Cmid, Cout, H, W, K = 2, 4, 8, 8, 16, 16, 2

    key = jax.random.PRNGKey(0)
    k1, k2, k3, k4, k5 = jax.random.split(key, 5)
    x = jax.random.normal(k1, (N, Cin, H, W), jnp.float32)
    w1 = jax.random.normal(k2, (3, 3, Cin, Cmid), jnp.float32) * 0.1
    b1 = jax.random.normal(k3, (Cmid,), jnp.float32) * 0.1
    w2 = jax.random.normal(k4, (3, 3, Cmid, Cout), jnp.float32) * 0.1
    b2 = jax.random.normal(k5, (Cout,), jnp.float32) * 0.1

    out = block_forward(x, w1, b1, w2, b2, pool_k=K)
    out = jax.block_until_ready(out)

    ref = _reference(x, w1, b1, w2, b2, K)
    assert out.shape == ref.shape, (out.shape, ref.shape)
    max_err = float(jnp.max(jnp.abs(out - ref)))
    if not jnp.allclose(out, ref, atol=2e-2, rtol=2e-2):
        raise SystemExit(f"mismatch: max abs err = {max_err}")

    print("KERNEL_OK")
</pallas_src>

<mosaic_0001>
module attributes {stable_mosaic.version = 11 : i64} {
  func.func @_block_kernel(%arg0: i32, %arg1: memref<1x16x16x4xf32, #tpu.memory_space<vmem>>, %arg2: memref<36x8xbf16, #tpu.memory_space<vmem>>, %arg3: memref<1x8xf32, #tpu.memory_space<vmem>>, %arg4: memref<72x8xbf16, #tpu.memory_space<vmem>>, %arg5: memref<1x8xf32, #tpu.memory_space<vmem>>, %arg6: memref<1x8x8x8xf32, #tpu.memory_space<vmem>>) attributes {dimension_semantics = [#tpu.dimension_semantics<parallel>], iteration_bounds = array<i64: 2>, scalar_prefetch = 0 : i64, scratch_operands = 0 : i64, tpu.core_type = #tpu.core_type<tc>, window_params = [{transform_indices = @transform_0, window_bounds = array<i64: 1, 16, 16, 4>}, {pipeline_mode = #tpu.pipeline_mode<synchronous>, transform_indices = @transform_1, window_bounds = array<i64: 36, 8>}, {pipeline_mode = #tpu.pipeline_mode<synchronous>, transform_indices = @transform_2, window_bounds = array<i64: 1, 8>}, {pipeline_mode = #tpu.pipeline_mode<synchronous>, transform_indices = @transform_3, window_bounds = array<i64: 72, 8>}, {pipeline_mode = #tpu.pipeline_mode<synchronous>, transform_indices = @transform_4, window_bounds = array<i64: 1, 8>}, {transform_indices = @transform_5, window_bounds = array<i64: 1, 8, 8, 8>}]} {
    %c0 = arith.constant 0 : index
    %c0_0 = arith.constant 0 : index
    %c0_1 = arith.constant 0 : index
    %c0_2 = arith.constant 0 : index
    %0 = vector.load %arg1[%c0, %c0_0, %c0_1, %c0_2] : memref<1x16x16x4xf32, #tpu.memory_space<vmem>>, vector<1x16x16x4xf32>
    %cst = arith.constant 0.000000e+00 : f32
    %1 = vector.broadcast %cst : f32 to vector<1x16x1x4xf32>
    %2 = tpu.concatenate %1, %0, %1 in 2 : vector<1x16x1x4xf32>, vector<1x16x16x4xf32>, vector<1x16x1x4xf32> -> vector<1x16x18x4xf32>
    %cst_3 = arith.constant 0.000000e+00 : f32
    %3 = vector.broadcast %cst_3 : f32 to vector<1x1x18x4xf32>
    %4 = tpu.concatenate %3, %2, %3 in 1 : vector<1x1x18x4xf32>, vector<1x16x18x4xf32>, vector<1x1x18x4xf32> -> vector<1x18x18x4xf32>
    %5 = vector.extract_strided_slice %4 {offsets = [0, 0, 0, 0], sizes = [1, 16, 16, 4], strides = [1, 1, 1, 1]} : vector<1x18x18x4xf32> to vector<1x16x16x4xf32>
    %6 = vector.extract_strided_slice %4 {offsets = [0, 0, 1, 0], sizes = [1, 16, 16, 4], strides = [1, 1, 1, 1]} : vector<1x18x18x4xf32> to vector<1x16x16x4xf32>
    %7 = vector.extract_strided_slice %4 {offsets = [0, 0, 2, 0], sizes = [1, 16, 16, 4], strides = [1, 1, 1, 1]} : vector<1x18x18x4xf32> to vector<1x16x16x4xf32>
    %8 = vector.extract_strided_slice %4 {offsets = [0, 1, 0, 0], sizes = [1, 16, 16, 4], strides = [1, 1, 1, 1]} : vector<1x18x18x4xf32> to vector<1x16x16x4xf32>
    %9 = vector.extract_strided_slice %4 {offsets = [0, 1, 1, 0], sizes = [1, 16, 16, 4], strides = [1, 1, 1, 1]} : vector<1x18x18x4xf32> to vector<1x16x16x4xf32>
    %10 = vector.extract_strided_slice %4 {offsets = [0, 1, 2, 0], sizes = [1, 16, 16, 4], strides = [1, 1, 1, 1]} : vector<1x18x18x4xf32> to vector<1x16x16x4xf32>
    %11 = vector.extract_strided_slice %4 {offsets = [0, 2, 0, 0], sizes = [1, 16, 16, 4], strides = [1, 1, 1, 1]} : vector<1x18x18x4xf32> to vector<1x16x16x4xf32>
    %12 = vector.extract_strided_slice %4 {offsets = [0, 2, 1, 0], sizes = [1, 16, 16, 4], strides = [1, 1, 1, 1]} : vector<1x18x18x4xf32> to vector<1x16x16x4xf32>
    %13 = vector.extract_strided_slice %4 {offsets = [0, 2, 2, 0], sizes = [1, 16, 16, 4], strides = [1, 1, 1, 1]} : vector<1x18x18x4xf32> to vector<1x16x16x4xf32>
    %14 = tpu.concatenate %5, %6, %7, %8, %9, %10, %11, %12, %13 in 3 : vector<1x16x16x4xf32>, vector<1x16x16x4xf32>, vector<1x16x16x4xf32>, vector<1x16x16x4xf32>, vector<1x16x16x4xf32>, vector<1x16x16x4xf32>, vector<1x16x16x4xf32>, vector<1x16x16x4xf32>, vector<1x16x16x4xf32> -> vector<1x16x16x36xf32>
    %15 = vector.shape_cast %14 : vector<1x16x16x36xf32> to vector<256x36xf32>
    %16 = arith.truncf %15 : vector<256x36xf32> to vector<256x36xbf16>
    %c0_4 = arith.constant 0 : index
    %c0_5 = arith.constant 0 : index
    %17 = vector.load %arg2[%c0_4, %c0_5] : memref<36x8xbf16, #tpu.memory_space<vmem>>, vector<36x8xbf16>
    %cst_6 = arith.constant dense<0.000000e+00> : vector<256x8xf32>
    %18 = tpu.matmul %16, %17, %cst_6 {dimension_numbers = #tpu.dot_dimension_numbers<[1], [0], [0], [1], [0, 0, 1, 1], [], []>} : vector<256x36xbf16>, vector<36x8xbf16>, vector<256x8xf32> -> vector<256x8xf32>
    %c0_7 = arith.constant 0 : index
    %c0_8 = arith.constant 0 : index
    %19 = vector.load %arg3[%c0_7, %c0_8] : memref<1x8xf32, #tpu.memory_space<vmem>>, vector<1x8xf32>
    %20 = vector.broadcast %19 : vector<1x8xf32> to vector<256x8xf32>
    %21 = arith.addf %18, %20 : vector<256x8xf32>
    %cst_9 = arith.constant 0.000000e+00 : f32
    %22 = vector.broadcast %cst_9 : f32 to vector<256x8xf32>
    %23 = arith.maximumf %21, %22 : vector<256x8xf32>
    %24 = vector.shape_cast %23 : vector<256x8xf32> to vector<1x16x16x8xf32>
    %cst_10 = arith.constant 0.000000e+00 : f32
    %25 = vector.broadcast %cst_10 : f32 to vector<1x16x1x8xf32>
    %26 = tpu.concatenate %25, %24, %25 in 2 : vector<1x16x1x8xf32>, vector<1x16x16x8xf32>, vector<1x16x1x8xf32> -> vector<1x16x18x8xf32>
    %cst_11 = arith.constant 0.000000e+00 : f32
    %27 = vector.broadcast %cst_11 : f32 to vector<1x1x18x8xf32>
    %28 = tpu.concatenate %27, %26, %27 in 1 : vector<1x1x18x8xf32>, vector<1x16x18x8xf32>, vector<1x1x18x8xf32> -> vector<1x18x18x8xf32>
    %29 = vector.extract_strided_slice %28 {offsets = [0, 0, 0, 0], sizes = [1, 16, 16, 8], strides = [1, 1, 1, 1]} : vector<1x18x18x8xf32> to vector<1x16x16x8xf32>
    %30 = vector.extract_strided_slice %28 {offsets = [0, 0, 1, 0], sizes = [1, 16, 16, 8], strides = [1, 1, 1, 1]} : vector<1x18x18x8xf32> to vector<1x16x16x8xf32>
    %31 = vector.extract_strided_slice %28 {offsets = [0, 0, 2, 0], sizes = [1, 16, 16, 8], strides = [1, 1, 1, 1]} : vector<1x18x18x8xf32> to vector<1x16x16x8xf32>
    %32 = vector.extract_strided_slice %28 {offsets = [0, 1, 0, 0], sizes = [1, 16, 16, 8], strides = [1, 1, 1, 1]} : vector<1x18x18x8xf32> to vector<1x16x16x8xf32>
    %33 = vector.extract_strided_slice %28 {offsets = [0, 1, 1, 0], sizes = [1, 16, 16, 8], strides = [1, 1, 1, 1]} : vector<1x18x18x8xf32> to vector<1x16x16x8xf32>
    %34 = vector.extract_strided_slice %28 {offsets = [0, 1, 2, 0], sizes = [1, 16, 16, 8], strides = [1, 1, 1, 1]} : vector<1x18x18x8xf32> to vector<1x16x16x8xf32>
    %35 = vector.extract_strided_slice %28 {offsets = [0, 2, 0, 0], sizes = [1, 16, 16, 8], strides = [1, 1, 1, 1]} : vector<1x18x18x8xf32> to vector<1x16x16x8xf32>
    %36 = vector.extract_strided_slice %28 {offsets = [0, 2, 1, 0], sizes = [1, 16, 16, 8], strides = [1, 1, 1, 1]} : vector<1x18x18x8xf32> to vector<1x16x16x8xf32>
    %37 = vector.extract_strided_slice %28 {offsets = [0, 2, 2, 0], sizes = [1, 16, 16, 8], strides = [1, 1, 1, 1]} : vector<1x18x18x8xf32> to vector<1x16x16x8xf32>
    %38 = tpu.concatenate %29, %30, %31, %32, %33, %34, %35, %36, %37 in 3 : vector<1x16x16x8xf32>, vector<1x16x16x8xf32>, vector<1x16x16x8xf32>, vector<1x16x16x8xf32>, vector<1x16x16x8xf32>, vector<1x16x16x8xf32>, vector<1x16x16x8xf32>, vector<1x16x16x8xf32>, vector<1x16x16x8xf32> -> vector<1x16x16x72xf32>
    %39 = vector.shape_cast %38 : vector<1x16x16x72xf32> to vector<256x72xf32>
    %40 = arith.truncf %39 : vector<256x72xf32> to vector<256x72xbf16>
    %c0_12 = arith.constant 0 : index
    %c0_13 = arith.constant 0 : index
    %41 = vector.load %arg4[%c0_12, %c0_13] : memref<72x8xbf16, #tpu.memory_space<vmem>>, vector<72x8xbf16>
    %cst_14 = arith.constant dense<0.000000e+00> : vector<256x8xf32>
    %42 = tpu.matmul %40, %41, %cst_14 {dimension_numbers = #tpu.dot_dimension_numbers<[1], [0], [0], [1], [0, 0, 1, 1], [], []>} : vector<256x72xbf16>, vector<72x8xbf16>, vector<256x8xf32> -> vector<256x8xf32>
    %c0_15 = arith.constant 0 : index
    %c0_16 = arith.constant 0 : index
    %43 = vector.load %arg5[%c0_15, %c0_16] : memref<1x8xf32, #tpu.memory_space<vmem>>, vector<1x8xf32>
    %44 = vector.broadcast %43 : vector<1x8xf32> to vector<256x8xf32>
    %45 = arith.addf %42, %44 : vector<256x8xf32>
    %cst_17 = arith.constant 0.000000e+00 : f32
    %46 = vector.broadcast %cst_17 : f32 to vector<256x8xf32>
    %47 = arith.maximumf %45, %46 : vector<256x8xf32>
    %48 = vector.shape_cast %47 : vector<256x8xf32> to vector<1x16x16x8xf32>
    %49 = vector.shape_cast %48 : vector<1x16x16x8xf32> to vector<1x8x2x16x8xf32>
    %50 = vector.extract_strided_slice %49 {offsets = [0, 0, 0, 0, 0], sizes = [1, 8, 1, 16, 8], strides = [1, 1, 1, 1, 1]} : vector<1x8x2x16x8xf32> to vector<1x8x1x16x8xf32>
    %51 = vector.shape_cast %50 : vector<1x8x1x16x8xf32> to vector<1x8x16x8xf32>
    %52 = vector.extract_strided_slice %49 {offsets = [0, 0, 1, 0, 0], sizes = [1, 8, 1, 16, 8], strides = [1, 1, 1, 1, 1]} : vector<1x8x2x16x8xf32> to vector<1x8x1x16x8xf32>
    %53 = vector.shape_cast %52 : vector<1x8x1x16x8xf32> to vector<1x8x16x8xf32>
    %54 = arith.maximumf %51, %53 : vector<1x8x16x8xf32>
    %55 = vector.extract_strided_slice %54 {offsets = [0, 0, 0, 0], sizes = [1, 8, 1, 8], strides = [1, 1, 1, 1]} : vector<1x8x16x8xf32> to vector<1x8x1x8xf32>
    %56 = vector.extract_strided_slice %54 {offsets = [0, 0, 1, 0], sizes = [1, 8, 1, 8], strides = [1, 1, 1, 1]} : vector<1x8x16x8xf32> to vector<1x8x1x8xf32>
    %57 = arith.maximumf %55, %56 : vector<1x8x1x8xf32>
    %58 = vector.extract_strided_slice %54 {offsets = [0, 0, 2, 0], sizes = [1, 8, 1, 8], strides = [1, 1, 1, 1]} : vector<1x8x16x8xf32> to vector<1x8x1x8xf32>
    %59 = vector.extract_strided_slice %54 {offsets = [0, 0, 3, 0], sizes = [1, 8, 1, 8], strides = [1, 1, 1, 1]} : vector<1x8x16x8xf32> to vector<1x8x1x8xf32>
    %60 = arith.maximumf %58, %59 : vector<1x8x1x8xf32>
    %61 = vector.extract_strided_slice %54 {offsets = [0, 0, 4, 0], sizes = [1, 8, 1, 8], strides = [1, 1, 1, 1]} : vector<1x8x16x8xf32> to vector<1x8x1x8xf32>
    %62 = vector.extract_strided_slice %54 {offsets = [0, 0, 5, 0], sizes = [1, 8, 1, 8], strides = [1, 1, 1, 1]} : vector<1x8x16x8xf32> to vector<1x8x1x8xf32>
    %63 = arith.maximumf %61, %62 : vector<1x8x1x8xf32>
    %64 = vector.extract_strided_slice %54 {offsets = [0, 0, 6, 0], sizes = [1, 8, 1, 8], strides = [1, 1, 1, 1]} : vector<1x8x16x8xf32> to vector<1x8x1x8xf32>
    %65 = vector.extract_strided_slice %54 {offsets = [0, 0, 7, 0], sizes = [1, 8, 1, 8], strides = [1, 1, 1, 1]} : vector<1x8x16x8xf32> to vector<1x8x1x8xf32>
    %66 = arith.maximumf %64, %65 : vector<1x8x1x8xf32>
    %67 = vector.extract_strided_slice %54 {offsets = [0, 0, 8, 0], sizes = [1, 8, 1, 8], strides = [1, 1, 1, 1]} : vector<1x8x16x8xf32> to vector<1x8x1x8xf32>
    %68 = vector.extract_strided_slice %54 {offsets = [0, 0, 9, 0], sizes = [1, 8, 1, 8], strides = [1, 1, 1, 1]} : vector<1x8x16x8xf32> to vector<1x8x1x8xf32>
    %69 = arith.maximumf %67, %68 : vector<1x8x1x8xf32>
    %70 = vector.extract_strided_slice %54 {offsets = [0, 0, 10, 0], sizes = [1, 8, 1, 8], strides = [1, 1, 1, 1]} : vector<1x8x16x8xf32> to vector<1x8x1x8xf32>
    %71 = vector.extract_strided_slice %54 {offsets = [0, 0, 11, 0], sizes = [1, 8, 1, 8], strides = [1, 1, 1, 1]} : vector<1x8x16x8xf32> to vector<1x8x1x8xf32>
    %72 = arith.maximumf %70, %71 : vector<1x8x1x8xf32>
    %73 = vector.extract_strided_slice %54 {offsets = [0, 0, 12, 0], sizes = [1, 8, 1, 8], strides = [1, 1, 1, 1]} : vector<1x8x16x8xf32> to vector<1x8x1x8xf32>
    %74 = vector.extract_strided_slice %54 {offsets = [0, 0, 13, 0], sizes = [1, 8, 1, 8], strides = [1, 1, 1, 1]} : vector<1x8x16x8xf32> to vector<1x8x1x8xf32>
    %75 = arith.maximumf %73, %74 : vector<1x8x1x8xf32>
    %76 = vector.extract_strided_slice %54 {offsets = [0, 0, 14, 0], sizes = [1, 8, 1, 8], strides = [1, 1, 1, 1]} : vector<1x8x16x8xf32> to vector<1x8x1x8xf32>
    %77 = vector.extract_strided_slice %54 {offsets = [0, 0, 15, 0], sizes = [1, 8, 1, 8], strides = [1, 1, 1, 1]} : vector<1x8x16x8xf32> to vector<1x8x1x8xf32>
    %78 = arith.maximumf %76, %77 : vector<1x8x1x8xf32>
    %79 = tpu.concatenate %57, %60, %63, %66, %69, %72, %75, %78 in 2 : vector<1x8x1x8xf32>, vector<1x8x1x8xf32>, vector<1x8x1x8xf32>, vector<1x8x1x8xf32>, vector<1x8x1x8xf32>, vector<1x8x1x8xf32>, vector<1x8x1x8xf32>, vector<1x8x1x8xf32> -> vector<1x8x8x8xf32>
    %c0_18 = arith.constant 0 : index
    %c0_19 = arith.constant 0 : index
    %c0_20 = arith.constant 0 : index
    %c0_21 = arith.constant 0 : index
    %80 = vector.load %arg6[%c0_18, %c0_19, %c0_20, %c0_21] : memref<1x8x8x8xf32, #tpu.memory_space<vmem>>, vector<1x8x8x8xf32>
    tpu.vector_store %arg6[%c0_18, %c0_19, %c0_20, %c0_21], %79 {strides = array<i32>} : memref<1x8x8x8xf32, #tpu.memory_space<vmem>>, vector<1x8x8x8xf32>,
    return
  }
  func.func @transform_0(%arg0: i32) -> (i32, i32, i32, i32) {
    %c0_i32 = arith.constant 0 : i32
    %c0_i32_0 = arith.constant 0 : i32
    %c0_i32_1 = arith.constant 0 : i32
    %c0_i32_2 = arith.constant 0 : i32
    return %arg0, %c0_i32, %c0_i32_0, %c0_i32_1 : i32, i32, i32, i32
  }
  func.func @transform_1(%arg0: i32) -> (i32, i32) {
    %c0_i32 = arith.constant 0 : i32
    %c0_i32_0 = arith.constant 0 : i32
    %c0_i32_1 = arith.constant 0 : i32
    return %c0_i32, %c0_i32_0 : i32, i32
  }
  func.func @transform_2(%arg0: i32) -> (i32, i32) {
    %c0_i32 = arith.constant 0 : i32
    %c0_i32_0 = arith.constant 0 : i32
    %c0_i32_1 = arith.constant 0 : i32
    return %c0_i32, %c0_i32_0 : i32, i32
  }
  func.func @transform_3(%arg0: i32) -> (i32, i32) {
    %c0_i32 = arith.constant 0 : i32
    %c0_i32_0 = arith.constant 0 : i32
    %c0_i32_1 = arith.constant 0 : i32
    return %c0_i32, %c0_i32_0 : i32, i32
  }
  func.func @transform_4(%arg0: i32) -> (i32, i32) {
    %c0_i32 = arith.constant 0 : i32
    %c0_i32_0 = arith.constant 0 : i32
    %c0_i32_1 = arith.constant 0 : i32
    return %c0_i32, %c0_i32_0 : i32, i32
  }
  func.func @transform_5(%arg0: i32) -> (i32, i32, i32, i32) {
    %c0_i32 = arith.constant 0 : i32
    %c0_i32_0 = arith.constant 0 : i32
    %c0_i32_1 = arith.constant 0 : i32
    %c0_i32_2 = arith.constant 0 : i32
    return %arg0, %c0_i32, %c0_i32_0, %c0_i32_1 : i32, i32, i32, i32
  }
}

</mosaic_0001>

<llo_original>
// kernel: tpu_custom_call.1
$region0: #{tpu_custom_call.1}
  #allocation0 [shape = 'u32[]', space=smem, size = 0x4, offset = 0x4, fixed_abs, tag = 'smem constant byte address 0x4 - core index']
  #allocation1 [shape = 'u32[72,128]{1,0:T(1,128)}', space=vmem, size = 0x9000, scoped, tag = 'internal scratch']
  %s0 = inlined_call_operand.vmem [shape: f32[2,16,16,4], index: 0, kind: input, shape index: {}]
  %s1 = inlined_call_operand.vmem [shape: bf16[36,8], index: 1, kind: input, shape index: {}]
  %s2 = inlined_call_operand.vmem [shape: f32[1,8], index: 2, kind: input, shape index: {}]
  %s3 = inlined_call_operand.vmem [shape: bf16[72,8], index: 3, kind: input, shape index: {}]
  %s4 = inlined_call_operand.vmem [shape: f32[1,8], index: 4, kind: input, shape index: {}]
  %s5 = inlined_call_operand.hbm [shape: f32[2,8,8,8], index: 5, kind: output, shape index: {}]
  %s6 = sld [smem:[#allocation0]]
  $region53: #{tpu_custom_call.1} parent=0
    _
  %s8 = ssub.s32 1, %s6
  %s9 = scalar_select 0, %s8, %s6
  $region1: #{tpu_custom_call.1} parent=0
    #allocation2 [shape = 'u8[65536]{0}', space=vmem, size = 0x10000, scoped, tag = 'output window, operand 0']
    #allocation3 [shape = 's32[2]{0}', space=sflag, size = 0x8, scoped, tag = 'scoped memory for tpu_custom_call.1']
    %10 = vsyncpa [#allocation3], 0
    %s11 = scalar_lea.sflag [#allocation3], 1
    %12 = vsyncpa %s11, 0
    loop: start=0, step=1, limit=4
    $region2: #{tpu_custom_call.1} parent=1 // loop_pre_header
      _
    $region3: #{tpu_custom_call.1} parent=1 // loop_header
      %s14 = sphi 0, %s18
      %p15 = scmp.ge.s32.totalorder %s14, 4
      %s24 = sphi 0, %s26
      %s27 = sphi 0, %s24
      %s28 = sphi 0, %s27
      %s44 = sphi 0, %s28
      %s48 = sphi 0, %s48
      %s50 = sphi 0, %s48
      %s51 = sphi 0, %s50
      %s65 = sphi 0, %s51
      %s69 = sphi 0, %s69
      %s71 = sphi 0, %s69
      %s72 = sphi 0, %s71
      %s86 = sphi 0, %s72
      %s90 = sphi 0, %s90
      %s92 = sphi 0, %s90
      %s93 = sphi 0, %s92
      %s107 = sphi 0, %s93
      %s111 = sphi 0, %s111
      %s113 = sphi 0, %s111
      %s114 = sphi 0, %s113
      %s128 = sphi 0, %s114
      %s134 = sphi 0, %s136
      %s137 = sphi 0, %s134
      %s138 = sphi 0, %s137
      %s154 = sphi 0, %s138
    $region4: #{tpu_custom_call.1} parent=1 // loop_header_branch
      %17 = sbr.rel (%p15) target = $region8
    $region5: #{tpu_custom_call.1} parent=1 // loop_body
      %s19 = ssub.s32 %s14, 1
      %s20 = ssub.s32 %s14, 2
      %s21 = sadd.s32 %s14, 1
      %s22 = ssub.s32 %s14, %s21
      %p23 = scmp.eq.s32.totalorder %s22, 0
      %s25 = sadd.s32 %s24, 1
      %s26 = scalar_select %p23, %s24, %s25
      %p29 = pneg %p23
      %p30 = scmp.eq.s32.totalorder %s14, 1
      %p31 = por %p29, %p30
      %p32 = scmp.ne.s32.totalorder %s24, %s27
      %p33 = scmp.eq.s32.totalorder %s14, 0
      %p34 = por %p32, %p33
      %p35 = scmp.ne.s32.totalorder %s24, %s27
      %p36 = scmp.eq.s32.totalorder %s19, 1
      %p37 = por %p35, %p36
      %p38 = scmp.ne.s32.totalorder %s27, %s28
      %p39 = scmp.eq.s32.totalorder %s19, 0
      %p40 = por %p38, %p39
      %p41 = scmp.ne.s32.totalorder %s27, %s28
      %p42 = scmp.eq.s32.totalorder %s20, 1
      %p43 = por %p41, %p42
      %p45 = scmp.ne.s32.totalorder %s28, %s44
      %p46 = scmp.eq.s32.totalorder %s20, 0
      %p47 = por %p45, %p46
      %s49 = sadd.s32 %s48, 1
      %p52 = scmp.eq.s32.totalorder %s14, 1
      %p53 = scmp.ne.s32.totalorder %s48, %s50
      %p54 = scmp.eq.s32.totalorder %s14, 0
      %p55 = por %p53, %p54
      %p56 = scmp.ne.s32.totalorder %s48, %s50
      %p57 = scmp.eq.s32.totalorder %s19, 1
      %p58 = por %p56, %p57
      %p59 = scmp.ne.s32.totalorder %s50, %s51
      %p60 = scmp.eq.s32.totalorder %s19, 0
      %p61 = por %p59, %p60
      %p62 = scmp.ne.s32.totalorder %s50, %s51
      %p63 = scmp.eq.s32.totalorder %s20, 1
      %p64 = por %p62, %p63
      %p66 = scmp.ne.s32.totalorder %s51, %s65
      %p67 = scmp.eq.s32.totalorder %s20, 0
      %p68 = por %p66, %p67
      %s70 = sadd.s32 %s69, 1
      %p73 = scmp.eq.s32.totalorder %s14, 1
      %p74 = scmp.ne.s32.totalorder %s69, %s71
      %p75 = scmp.eq.s32.totalorder %s14, 0
      %p76 = por %p74, %p75
      %p77 = scmp.ne.s32.totalorder %s69, %s71
      %p78 = scmp.eq.s32.totalorder %s19, 1
      %p79 = por %p77, %p78
      %p80 = scmp.ne.s32.totalorder %s71, %s72
      %p81 = scmp.eq.s32.totalorder %s19, 0
      %p82 = por %p80, %p81
      %p83 = scmp.ne.s32.totalorder %s71, %s72
      %p84 = scmp.eq.s32.totalorder %s20, 1
      %p85 = por %p83, %p84
      %p87 = scmp.ne.s32.totalorder %s72, %s86
      %p88 = scmp.eq.s32.totalorder %s20, 0
      %p89 = por %p87, %p88
      %s91 = sadd.s32 %s90, 1
      %p94 = scmp.eq.s32.totalorder %s14, 1
      %p95 = scmp.ne.s32.totalorder %s90, %s92
      %p96 = scmp.eq.s32.totalorder %s14, 0
      %p97 = por %p95, %p96
      %p98 = scmp.ne.s32.totalorder %s90, %s92
      %p99 = scmp.eq.s32.totalorder %s19, 1
      %p100 = por %p98, %p99
      %p101 = scmp.ne.s32.totalorder %s92, %s93
      %p102 = scmp.eq.s32.totalorder %s19, 0
      %p103 = por %p101, %p102
      %p104 = scmp.ne.s32.totalorder %s92, %s93
      %p105 = scmp.eq.s32.totalorder %s20, 1
      %p106 = por %p104, %p105
      %p108 = scmp.ne.s32.totalorder %s93, %s107
      %p109 = scmp.eq.s32.totalorder %s20, 0
      %p110 = por %p108, %p109
      %s112 = sadd.s32 %s111, 1
      %p115 = scmp.eq.s32.totalorder %s14, 1
      %p116 = scmp.ne.s32.totalorder %s111, %s113
      %p117 = scmp.eq.s32.totalorder %s14, 0
      %p118 = por %p116, %p117
      %p119 = scmp.ne.s32.totalorder %s111, %s113
      %p120 = scmp.eq.s32.totalorder %s19, 1
      %p121 = por %p119, %p120
      %p122 = scmp.ne.s32.totalorder %s113, %s114
      %p123 = scmp.eq.s32.totalorder %s19, 0
      %p124 = por %p122, %p123
      %p125 = scmp.ne.s32.totalorder %s113, %s114
      %p126 = scmp.eq.s32.totalorder %s20, 1
      %p127 = por %p125, %p126
      %p129 = scmp.ne.s32.totalorder %s114, %s128
      %p130 = scmp.eq.s32.totalorder %s20, 0
      %p131 = por %p129, %p130
      %s132 = ssub.s32 %s14, %s21
      %p133 = scmp.eq.s32.totalorder %s132, 0
      %s135 = sadd.s32 %s134, 1
      %s136 = scalar_select %p133, %s134, %s135
      %p139 = pneg %p133
      %p140 = scmp.eq.s32.totalorder %s14, 1
      %p141 = por %p139, %p140
      %p142 = scmp.ne.s32.totalorder %s134, %s137
      %p143 = scmp.eq.s32.totalorder %s14, 0
      %p144 = por %p142, %p143
      %p145 = scmp.ne.s32.totalorder %s134, %s137
      %p146 = scmp.eq.s32.totalorder %s19, 1
      %p147 = por %p145, %p146
      %p148 = scmp.ne.s32.totalorder %s137, %s138
      %p149 = scmp.eq.s32.totalorder %s19, 0
      %p150 = por %p148, %p149
      %p151 = scmp.ne.s32.totalorder %s137, %s138
      %p152 = scmp.eq.s32.totalorder %s20, 1
      %p153 = por %p151, %p152
      %p155 = scmp.ne.s32.totalorder %s138, %s154
      %p156 = scmp.eq.s32.totalorder %s20, 0
      %p157 = por %p155, %p156
      %p158 = scmp.le.s32.totalorder 1, %s14
      %p159 = scmp.lt.s32.totalorder %s14, 3
      %p160 = pnand %p158, %p159
      %p161 = pneg %p160
      // Predicated region
      $region9: #{tpu_custom_call.1} parent=5 // pred_check
        _
      $region10: #{tpu_custom_call.1} parent=5 // pred_check_branch
        %163 = sbr.rel (%p160) target = $region12
      $region11: #{tpu_custom_call.1} parent=5 // pred_region
        %s164 = ssub.s32 %s14, 1
        // Predicated region
        $region13: #{tpu_custom_call.1} parent=11 // pred_check
          %p165 = pneg %p61
        $region14: #{tpu_custom_call.1} parent=11 // pred_check_branch
          %167 = sbr.rel (%p165) target = $region16
        $region15: #{tpu_custom_call.1} parent=11 // pred_region
          _
        $region16: #{tpu_custom_call.1} parent=11 // pred_fallthru
          _
        // Predicated region
        $region17: #{tpu_custom_call.1} parent=11 // pred_check
          %p168 = pneg %p82
        $region18: #{tpu_custom_call.1} parent=11 // pred_check_branch
          %170 = sbr.rel (%p168) target = $region20
        $region19: #{tpu_custom_call.1} parent=11 // pred_region
          _
        $region20: #{tpu_custom_call.1} parent=11 // pred_fallthru
          _
        // Predicated region
        $region21: #{tpu_custom_call.1} parent=11 // pred_check
          %p171 = pneg %p103
        $region22: #{tpu_custom_call.1} parent=11 // pred_check_branch
          %173 = sbr.rel (%p171) target = $region24
        $region23: #{tpu_custom_call.1} parent=11 // pred_region
          _
        $region24: #{tpu_custom_call.1} parent=11 // pred_fallthru
          _
        // Predicated region
        $region25: #{tpu_custom_call.1} parent=11 // pred_check
          %p174 = pneg %p124
        $region26: #{tpu_custom_call.1} parent=11 // pred_check_branch
          %176 = sbr.rel (%p174) target = $region28
        $region27: #{tpu_custom_call.1} parent=11 // pred_region
          _
        $region28: #{tpu_custom_call.1} parent=11 // pred_fallthru
          _
      $region12: #{tpu_custom_call.1} parent=5 // pred_fallthru
        _
      %p177 = scmp.lt.s32.totalorder %s14, 2
      // Predicated region
      $region29: #{tpu_custom_call.1} parent=5 // pred_check
        %p178 = pneg %p177
      $region30: #{tpu_custom_call.1} parent=5 // pred_check_branch
        %180 = sbr.rel (%p178) target = $region32
      $region31: #{tpu_custom_call.1} parent=5 // pred_region
        // Predicated region
        $region33: #{tpu_custom_call.1} parent=31 // pred_check
          %p181 = pneg %p34
        $region34: #{tpu_custom_call.1} parent=31 // pred_check_branch
          %183 = sbr.rel (%p181) target = $region36
        $region35: #{tpu_custom_call.1} parent=31 // pred_region
          %p184 = scmp.lt.s32.totalorder %s14, 1
          %s185 = scalar_select %p184, %s14, 1
          %s186 = smul.addr %s185, 32
          %s187 = smul.addr %s186, 8
          %s188 = scalar_lea.vmem %s0, %s187
        $region36: #{tpu_custom_call.1} parent=31 // pred_fallthru
          _
      $region32: #{tpu_custom_call.1} parent=5 // pred_fallthru
        _
      %p189 = scmp.le.s32.totalorder 1, %s14
      %p190 = scmp.lt.s32.totalorder %s14, 3
      %p191 = pnand %p189, %p190
      %p192 = pneg %p191
      // Predicated region
      $region37: #{tpu_custom_call.1} parent=5 // pred_check
        _
      $region38: #{tpu_custom_call.1} parent=5 // pred_check_branch
        %194 = sbr.rel (%p191) target = $region40
      $region39: #{tpu_custom_call.1} parent=5 // pred_region
        %s195 = ssub.s32 %s14, 1
        %p196 = scmp.lt.s32.totalorder %s19, 1
        %s197 = scalar_select %p196, %s19, 1
        %s198 = smul.addr %s197, 32
        %s199 = smul.addr %s198, 8
        %s200 = scalar_lea.vmem %s0, %s199
        %p201 = pneg %p40
        %p202 = pneg %p37
        %p203 = pneg %p61
        %p204 = pneg %p58
        %p205 = pneg %p82
        %p206 = pneg %p79
        %p207 = pneg %p103
        %p208 = pneg %p100
        %p209 = pneg %p124
        %p210 = pneg %p121
        %p211 = pneg %p150
        %p212 = pneg %p147
        %s213 = sand.u32 %s137, 1
        %s214 = scalar_lea.sflag [#allocation3], %s213
        %s215 = sand.u32 %s137, 1
        %s216 = smul.addr %s215, 64
        %s217 = scalar_lea.vmem [#allocation2], %s216
        %p218 = scmp.lt.s32.totalorder %s19, 1
        %s219 = scalar_select %p218, %s19, 1
        %s220 = smul.addr %s219, 32
        %s221 = smul.addr %s220, 8
        %s222 = scalar_lea.vmem %s0, %s221
        %v224 = vld [vmem:[%s222] sm:$0xff]
        %v225 = vld [vmem:[%s222 + $0x8] sm:$0xff]
        %v226 = vld [vmem:[%s222 + $0x10] sm:$0xff]
        %v227 = vld [vmem:[%s222 + $0x18] sm:$0xff]
        %v228 = vld [vmem:[%s222 + $0x20] sm:$0xff]
        %v229 = vld [vmem:[%s222 + $0x28] sm:$0xff]
        %v230 = vld [vmem:[%s222 + $0x30] sm:$0xff]
        %v231 = vld [vmem:[%s222 + $0x38] sm:$0xff]
        %v232 = vld [vmem:[%s222 + $0x40] sm:$0xff]
        %v233 = vld [vmem:[%s222 + $0x48] sm:$0xff]
        %v234 = vld [vmem:[%s222 + $0x50] sm:$0xff]
        %v235 = vld [vmem:[%s222 + $0x58] sm:$0xff]
        %v236 = vld [vmem:[%s222 + $0x60] sm:$0xff]
        %v237 = vld [vmem:[%s222 + $0x68] sm:$0xff]
        %v238 = vld [vmem:[%s222 + $0x70] sm:$0xff]
        %v239 = vld [vmem:[%s222 + $0x78] sm:$0xff]
        %v240 = vld [vmem:[%s222 + $0x80] sm:$0xff]
        %v241 = vld [vmem:[%s222 + $0x88] sm:$0xff]
        %v242 = vld [vmem:[%s222 + $0x90] sm:$0xff]
        %v243 = vld [vmem:[%s222 + $0x98] sm:$0xff]
        %v244 = vld [vmem:[%s222 + $0xa0] sm:$0xff]
        %v245 = vld [vmem:[%s222 + $0xa8] sm:$0xff]
        %v246 = vld [vmem:[%s222 + $0xb0] sm:$0xff]
        %v247 = vld [vmem:[%s222 + $0xb8] sm:$0xff]
        %v248 = vld [vmem:[%s222 + $0xc0] sm:$0xff]
        %v249 = vld [vmem:[%s222 + $0xc8] sm:$0xff]
        %v250 = vld [vmem:[%s222 + $0xd0] sm:$0xff]
        %v251 = vld [vmem:[%s222 + $0xd8] sm:$0xff]
        %v252 = vld [vmem:[%s222 + $0xe0] sm:$0xff]
        %v253 = vld [vmem:[%s222 + $0xe8] sm:$0xff]
        %v254 = vld [vmem:[%s222 + $0xf0] sm:$0xff]
        %v255 = vld [vmem:[%s222 + $0xf8] sm:$0xff]
        %vm288 = vcmask 1040384
        %v289 = vrot.slane %v224, 7
        %v290 = vrot.slane %v225, 7
        %v291 = vsel %vm288, %v289, %v290
        %v292 = vrot.slane %v226, 7
        %v293 = vrot.slane %v227, 7
        %v294 = vsel %vm288, %v292, %v293
        %v295 = vrot.slane %v228, 7
        %v296 = vrot.slane %v229, 7
        %v297 = vsel %vm288, %v295, %v296
        %v298 = vrot.slane %v230, 7
        %v299 = vrot.slane %v231, 7
        %v300 = vsel %vm288, %v298, %v299
        %v301 = vrot.slane %v232, 7
        %v302 = vrot.slane %v233, 7
        %v303 = vsel %vm288, %v301, %v302
        %v304 = vrot.slane %v234, 7
        %v305 = vrot.slane %v235, 7
        %v306 = vsel %vm288, %v304, %v305
        %v307 = vrot.slane %v236, 7
        %v308 = vrot.slane %v237, 7
        %v309 = vsel %vm288, %v307, %v308
        %v310 = vrot.slane %v238, 7
        %v311 = vrot.slane %v239, 7
        %v312 = vsel %vm288, %v310, %v311
        %v313 = vrot.slane %v240, 7
        %v314 = vrot.slane %v241, 7
        %v315 = vsel %vm288, %v313, %v314
        %v316 = vrot.slane %v242, 7
        %v317 = vrot.slane %v243, 7
        %v318 = vsel %vm288, %v316, %v317
        %v319 = vrot.slane %v244, 7
        %v320 = vrot.slane %v245, 7
        %v321 = vsel %vm288, %v319, %v320
        %v322 = vrot.slane %v246, 7
        %v323 = vrot.slane %v247, 7
        %v324 = vsel %vm288, %v322, %v323
        %v325 = vrot.slane %v248, 7
        %v326 = vrot.slane %v249, 7
        %v327 = vsel %vm288, %v325, %v326
        %v328 = vrot.slane %v250, 7
        %v329 = vrot.slane %v251, 7
        %v330 = vsel %vm288, %v328, %v329
        %v331 = vrot.slane %v252, 7
        %v332 = vrot.slane %v253, 7
        %v333 = vsel %vm288, %v331, %v332
        %v334 = vrot.slane %v254, 7
        %v335 = vrot.slane %v255, 7
        %v336 = vsel %vm288, %v334, %v335
        %v384 = vsel %vm288, 0.0, %v289
        %v385 = vsel %vm288, 0.0, %v292
        %v386 = vsel %vm288, 0.0, %v295
        %v387 = vsel %vm288, 0.0, %v298
        %v388 = vsel %vm288, 0.0, %v301
        %v389 = vsel %vm288, 0.0, %v304
        %v390 = vsel %vm288, 0.0, %v307
        %v391 = vsel %vm288, 0.0, %v310
        %v392 = vsel %vm288, 0.0, %v313
        %v393 = vsel %vm288, 0.0, %v316
        %v394 = vsel %vm288, 0.0, %v319
        %v395 = vsel %vm288, 0.0, %v322
        %v396 = vsel %vm288, 0.0, %v325
        %v397 = vsel %vm288, 0.0, %v328
        %v398 = vsel %vm288, 0.0, %v331
        %v399 = vsel %vm288, 0.0, %v334
        %v400 = vsel %vm288, %v290, 0.0
        %v401 = vsel %vm288, %v293, 0.0
        %v402 = vsel %vm288, %v296, 0.0
        %v403 = vsel %vm288, %v299, 0.0
        %v404 = vsel %vm288, %v302, 0.0
        %v405 = vsel %vm288, %v305, 0.0
        %v406 = vsel %vm288, %v308, 0.0
        %v407 = vsel %vm288, %v311, 0.0
        %v408 = vsel %vm288, %v314, 0.0
        %v409 = vsel %vm288, %v317, 0.0
        %v410 = vsel %vm288, %v320, 0.0
        %v411 = vsel %vm288, %v323, 0.0
        %v412 = vsel %vm288, %v326, 0.0
        %v413 = vsel %vm288, %v329, 0.0
        %v414 = vsel %vm288, %v332, 0.0
        %v415 = vsel %vm288, %v335, 0.0
        %vm447 = vcmask 1046528
        %v448 = vrot.slane 0.0, 1
        %v449 = vsel %vm447, %v448, %v448
        %v450 = vrot.slane %v384, 1
        %v451 = vrot.slane %v291, 1
        %v452 = vsel %vm447, %v450, %v451
        %v453 = vrot.slane %v400, 1
        %v454 = vsel %vm447, %v451, %v453
        %v455 = vrot.slane %v385, 1
        %v456 = vrot.slane %v294, 1
        %v457 = vsel %vm447, %v455, %v456
        %v458 = vrot.slane %v401, 1
        %v459 = vsel %vm447, %v456, %v458
        %v460 = vrot.slane %v386, 1
        %v461 = vrot.slane %v297, 1
        %v462 = vsel %vm447, %v460, %v461
        %v463 = vrot.slane %v402, 1
        %v464 = vsel %vm447, %v461, %v463
        %v465 = vrot.slane %v387, 1
        %v466 = vrot.slane %v300, 1
        %v467 = vsel %vm447, %v465, %v466
        %v468 = vrot.slane %v403, 1
        %v469 = vsel %vm447, %v466, %v468
        %v470 = vrot.slane %v388, 1
        %v471 = vrot.slane %v303, 1
        %v472 = vsel %vm447, %v470, %v471
        %v473 = vrot.slane %v404, 1
        %v474 = vsel %vm447, %v471, %v473
        %v475 = vrot.slane %v389, 1
        %v476 = vrot.slane %v306, 1
        %v477 = vsel %vm447, %v475, %v476
        %v478 = vrot.slane %v405, 1
        %v479 = vsel %vm447, %v476, %v478
        %v480 = vrot.slane %v390, 1
        %v481 = vrot.slane %v309, 1
        %v482 = vsel %vm447, %v480, %v481
        %v483 = vrot.slane %v406, 1
        %v484 = vsel %vm447, %v481, %v483
        %v485 = vrot.slane %v391, 1
        %v486 = vrot.slane %v312, 1
        %v487 = vsel %vm447, %v485, %v486
        %v488 = vrot.slane %v407, 1
        %v489 = vsel %vm447, %v486, %v488
        %v490 = vrot.slane %v392, 1
        %v491 = vrot.slane %v315, 1
        %v492 = vsel %vm447, %v490, %v491
        %v493 = vrot.slane %v408, 1
        %v494 = vsel %vm447, %v491, %v493
        %v495 = vrot.slane %v393, 1
        %v496 = vrot.slane %v318, 1
        %v497 = vsel %vm447, %v495, %v496
        %v498 = vrot.slane %v409, 1
        %v499 = vsel %vm447, %v496, %v498
        %v500 = vrot.slane %v394, 1
        %v501 = vrot.slane %v321, 1
        %v502 = vsel %vm447, %v500, %v501
        %v503 = vrot.slane %v410, 1
        %v504 = vsel %vm447, %v501, %v503
        %v505 = vrot.slane %v395, 1
        %v506 = vrot.slane %v324, 1
        %v507 = vsel %vm447, %v505, %v506
        %v508 = vrot.slane %v411, 1
        %v509 = vsel %vm447, %v506, %v508
        %v510 = vrot.slane %v396, 1
        %v511 = vrot.slane %v327, 1
        %v512 = vsel %vm447, %v510, %v511
        %v513 = vrot.slane %v412, 1
        %v514 = vsel %vm447, %v511, %v513
        %v515 = vrot.slane %v397, 1
        %v516 = vrot.slane %v330, 1
        %v517 = vsel %vm447, %v515, %v516
        %v518 = vrot.slane %v413, 1
        %v519 = vsel %vm447, %v516, %v518
        %v520 = vrot.slane %v398, 1
        %v521 = vrot.slane %v333, 1
        %v522 = vsel %vm447, %v520, %v521
        %v523 = vrot.slane %v414, 1
        %v524 = vsel %vm447, %v521, %v523
        %525 = vrot.lane.b32.xlu0 %v449, 4
        %v526 = vpop.permute.xlu0 %525
        %527 = vrot.lane.b32.xlu0 %v452, 4
        %v528 = vpop.permute.xlu0 %527
        %529 = vrot.lane.b32.xlu0 %v454, 4
        %v530 = vpop.permute.xlu0 %529
        %531 = vrot.lane.b32.xlu0 %v457, 4
        %v532 = vpop.permute.xlu0 %531
        %533 = vrot.lane.b32.xlu0 %v459, 4
        %v534 = vpop.permute.xlu0 %533
        %535 = vrot.lane.b32.xlu0 %v462, 4
        %v536 = vpop.permute.xlu0 %535
        %537 = vrot.lane.b32.xlu0 %v464, 4
        %v538 = vpop.permute.xlu0 %537
        %539 = vrot.lane.b32.xlu0 %v467, 4
        %v540 = vpop.permute.xlu0 %539
        %541 = vrot.lane.b32.xlu0 %v469, 4
        %v542 = vpop.permute.xlu0 %541
        %543 = vrot.lane.b32.xlu0 %v472, 4
        %v544 = vpop.permute.xlu0 %543
        %545 = vrot.lane.b32.xlu0 %v474, 4
        %v546 = vpop.permute.xlu0 %545
        %547 = vrot.lane.b32.xlu0 %v477, 4
        %v548 = vpop.permute.xlu0 %547
        %549 = vrot.lane.b32.xlu0 %v479, 4
        %v550 = vpop.permute.xlu0 %549
        %551 = vrot.lane.b32.xlu0 %v482, 4
        %v552 = vpop.permute.xlu0 %551
        %553 = vrot.lane.b32.xlu0 %v484, 4
        %v554 = vpop.permute.xlu0 %553
        %555 = vrot.lane.b32.xlu0 %v487, 4
        %v556 = vpop.permute.xlu0 %555
        %557 = vrot.lane.b32.xlu0 %v489, 4
        %v558 = vpop.permute.xlu0 %557
        %559 = vrot.lane.b32.xlu0 %v492, 4
        %v560 = vpop.permute.xlu0 %559
        %561 = vrot.lane.b32.xlu0 %v494, 4
        %v562 = vpop.permute.xlu0 %561
        %563 = vrot.lane.b32.xlu0 %v497, 4
        %v564 = vpop.permute.xlu0 %563
        %565 = vrot.lane.b32.xlu0 %v499, 4
        %v566 = vpop.permute.xlu0 %565
        %567 = vrot.lane.b32.xlu0 %v502, 4
        %v568 = vpop.permute.xlu0 %567
        %569 = vrot.lane.b32.xlu0 %v504, 4
        %v570 = vpop.permute.xlu0 %569
        %571 = vrot.lane.b32.xlu0 %v507, 4
        %v572 = vpop.permute.xlu0 %571
        %573 = vrot.lane.b32.xlu0 %v509, 4
        %v574 = vpop.permute.xlu0 %573
        %575 = vrot.lane.b32.xlu0 %v512, 4
        %v576 = vpop.permute.xlu0 %575
        %577 = vrot.lane.b32.xlu0 %v514, 4
        %v578 = vpop.permute.xlu0 %577
        %579 = vrot.lane.b32.xlu0 %v517, 4
        %v580 = vpop.permute.xlu0 %579
        %581 = vrot.lane.b32.xlu0 %v519, 4
        %v582 = vpop.permute.xlu0 %581
        %583 = vrot.lane.b32.xlu0 %v522, 4
        %v584 = vpop.permute.xlu0 %583
        %585 = vrot.lane.b32.xlu0 %v524, 4
        %v586 = vpop.permute.xlu0 %585
        %vm618 = vcmask 1045504
        %v619 = vrot.slane 0.0, 2
        %v620 = vsel %vm618, %v619, %v619
        %v621 = vrot.slane %v384, 2
        %v622 = vrot.slane %v291, 2
        %v623 = vsel %vm618, %v621, %v622
        %v624 = vrot.slane %v400, 2
        %v625 = vsel %vm618, %v622, %v624
        %v626 = vrot.slane %v385, 2
        %v627 = vrot.slane %v294, 2
        %v628 = vsel %vm618, %v626, %v627
        %v629 = vrot.slane %v401, 2
        %v630 = vsel %vm618, %v627, %v629
        %v631 = vrot.slane %v386, 2
        %v632 = vrot.slane %v297, 2
        %v633 = vsel %vm618, %v631, %v632
        %v634 = vrot.slane %v402, 2
        %v635 = vsel %vm618, %v632, %v634
        %v636 = vrot.slane %v387, 2
        %v637 = vrot.slane %v300, 2
        %v638 = vsel %vm618, %v636, %v637
        %v639 = vrot.slane %v403, 2
        %v640 = vsel %vm618, %v637, %v639
        %v641 = vrot.slane %v388, 2
        %v642 = vrot.slane %v303, 2
        %v643 = vsel %vm618, %v641, %v642
        %v644 = vrot.slane %v404, 2
        %v645 = vsel %vm618, %v642, %v644
        %v646 = vrot.slane %v389, 2
        %v647 = vrot.slane %v306, 2
        %v648 = vsel %vm618, %v646, %v647
        %v649 = vrot.slane %v405, 2
        %v650 = vsel %vm618, %v647, %v649
        %v651 = vrot.slane %v390, 2
        %v652 = vrot.slane %v309, 2
        %v653 = vsel %vm618, %v651, %v652
        %v654 = vrot.slane %v406, 2
        %v655 = vsel %vm618, %v652, %v654
        %v656 = vrot.slane %v391, 2
        %v657 = vrot.slane %v312, 2
        %v658 = vsel %vm618, %v656, %v657
        %v659 = vrot.slane %v407, 2
        %v660 = vsel %vm618, %v657, %v659
        %v661 = vrot.slane %v392, 2
        %v662 = vrot.slane %v315, 2
        %v663 = vsel %vm618, %v661, %v662
        %v664 = vrot.slane %v408, 2
        %v665 = vsel %vm618, %v662, %v664
        %v666 = vrot.slane %v393, 2
        %v667 = vrot.slane %v318, 2
        %v668 = vsel %vm618, %v666, %v667
        %v669 = vrot.slane %v409, 2
        %v670 = vsel %vm618, %v667, %v669
        %v671 = vrot.slane %v394, 2
        %v672 = vrot.slane %v321, 2
        %v673 = vsel %vm618, %v671, %v672
        %v674 = vrot.slane %v410, 2
        %v675 = vsel %vm618, %v672, %v674
        %v676 = vrot.slane %v395, 2
        %v677 = vrot.slane %v324, 2
        %v678 = vsel %vm618, %v676, %v677
        %v679 = vrot.slane %v411, 2
        %v680 = vsel %vm618, %v677, %v679
        %v681 = vrot.slane %v396, 2
        %v682 = vrot.slane %v327, 2
        %v683 = vsel %vm618, %v681, %v682
        %v684 = vrot.slane %v412, 2
        %v685 = vsel %vm618, %v682, %v684
        %v686 = vrot.slane %v397, 2
        %v687 = vrot.slane %v330, 2
        %v688 = vsel %vm618, %v686, %v687
        %v689 = vrot.slane %v413, 2
        %v690 = vsel %vm618, %v687, %v689
        %v691 = vrot.slane %v398, 2
        %v692 = vrot.slane %v333, 2
        %v693 = vsel %vm618, %v691, %v692
        %v694 = vrot.slane %v414, 2
        %v695 = vsel %vm618, %v692, %v694
        %696 = vrot.lane.b32.xlu0 %v620, 8
        %v697 = vpop.permute.xlu0 %696
        %698 = vrot.lane.b32.xlu0 %v623, 8
        %v699 = vpop.permute.xlu0 %698
        %700 = vrot.lane.b32.xlu0 %v625, 8
        %v701 = vpop.permute.xlu0 %700
        %702 = vrot.lane.b32.xlu0 %v628, 8
        %v703 = vpop.permute.xlu0 %702
        %704 = vrot.lane.b32.xlu0 %v630, 8
        %v705 = vpop.permute.xlu0 %704
        %706 = vrot.lane.b32.xlu0 %v633, 8
        %v707 = vpop.permute.xlu0 %706
        %708 = vrot.lane.b32.xlu0 %v635, 8
        %v709 = vpop.permute.xlu0 %708
        %710 = vrot.lane.b32.xlu0 %v638, 8
        %v711 = vpop.permute.xlu0 %710
        %712 = vrot.lane.b32.xlu0 %v640, 8
        %v713 = vpop.permute.xlu0 %712
        %714 = vrot.lane.b32.xlu0 %v643, 8
        %v715 = vpop.permute.xlu0 %714
        %716 = vrot.lane.b32.xlu0 %v645, 8
        %v717 = vpop.permute.xlu0 %716
        %718 = vrot.lane.b32.xlu0 %v648, 8
        %v719 = vpop.permute.xlu0 %718
        %720 = vrot.lane.b32.xlu0 %v650, 8
        %v721 = vpop.permute.xlu0 %720
        %722 = vrot.lane.b32.xlu0 %v653, 8
        %v723 = vpop.permute.xlu0 %722
        %724 = vrot.lane.b32.xlu0 %v655, 8
        %v725 = vpop.permute.xlu0 %724
        %726 = vrot.lane.b32.xlu0 %v658, 8
        %v727 = vpop.permute.xlu0 %726
        %728 = vrot.lane.b32.xlu0 %v660, 8
        %v729 = vpop.permute.xlu0 %728
        %730 = vrot.lane.b32.xlu0 %v663, 8
        %v731 = vpop.permute.xlu0 %730
        %732 = vrot.lane.b32.xlu0 %v665, 8
        %v733 = vpop.permute.xlu0 %732
        %734 = vrot.lane.b32.xlu0 %v668, 8
        %v735 = vpop.permute.xlu0 %734
        %736 = vrot.lane.b32.xlu0 %v670, 8
        %v737 = vpop.permute.xlu0 %736
        %738 = vrot.lane.b32.xlu0 %v673, 8
        %v739 = vpop.permute.xlu0 %738
        %740 = vrot.lane.b32.xlu0 %v675, 8
        %v741 = vpop.permute.xlu0 %740
        %742 = vrot.lane.b32.xlu0 %v678, 8
        %v743 = vpop.permute.xlu0 %742
        %744 = vrot.lane.b32.xlu0 %v680, 8
        %v745 = vpop.permute.xlu0 %744
        %746 = vrot.lane.b32.xlu0 %v683, 8
        %v747 = vpop.permute.xlu0 %746
        %748 = vrot.lane.b32.xlu0 %v685, 8
        %v749 = vpop.permute.xlu0 %748
        %750 = vrot.lane.b32.xlu0 %v688, 8
        %v751 = vpop.permute.xlu0 %750
        %752 = vrot.lane.b32.xlu0 %v690, 8
        %v753 = vpop.permute.xlu0 %752
        %754 = vrot.lane.b32.xlu0 %v693, 8
        %v755 = vpop.permute.xlu0 %754
        %756 = vrot.lane.b32.xlu0 %v695, 8
        %v757 = vpop.permute.xlu0 %756
        %790 = vrot.lane.b32.xlu0 %v384, 12
        %v791 = vpop.permute.xlu0 %790
        %792 = vrot.lane.b32.xlu0 %v291, 12
        %v793 = vpop.permute.xlu0 %792
        %794 = vrot.lane.b32.xlu0 %v385, 12
        %v795 = vpop.permute.xlu0 %794
        %796 = vrot.lane.b32.xlu0 %v294, 12
        %v797 = vpop.permute.xlu0 %796
        %798 = vrot.lane.b32.xlu0 %v386, 12
        %v799 = vpop.permute.xlu0 %798
        %800 = vrot.lane.b32.xlu0 %v297, 12
        %v801 = vpop.permute.xlu0 %800
        %802 = vrot.lane.b32.xlu0 %v387, 12
        %v803 = vpop.permute.xlu0 %802
        %804 = vrot.lane.b32.xlu0 %v300, 12
        %v805 = vpop.permute.xlu0 %804
        %806 = vrot.lane.b32.xlu0 %v388, 12
        %v807 = vpop.permute.xlu0 %806
        %808 = vrot.lane.b32.xlu0 %v303, 12
        %v809 = vpop.permute.xlu0 %808
        %810 = vrot.lane.b32.xlu0 %v389, 12
        %v811 = vpop.permute.xlu0 %810
        %812 = vrot.lane.b32.xlu0 %v306, 12
        %v813 = vpop.permute.xlu0 %812
        %814 = vrot.lane.b32.xlu0 %v390, 12
        %v815 = vpop.permute.xlu0 %814
        %816 = vrot.lane.b32.xlu0 %v309, 12
        %v817 = vpop.permute.xlu0 %816
        %818 = vrot.lane.b32.xlu0 %v391, 12
        %v819 = vpop.permute.xlu0 %818
        %820 = vrot.lane.b32.xlu0 %v312, 12
        %v821 = vpop.permute.xlu0 %820
        %822 = vrot.lane.b32.xlu0 %v392, 12
        %v823 = vpop.permute.xlu0 %822
        %824 = vrot.lane.b32.xlu0 %v315, 12
        %v825 = vpop.permute.xlu0 %824
        %826 = vrot.lane.b32.xlu0 %v393, 12
        %v827 = vpop.permute.xlu0 %826
        %828 = vrot.lane.b32.xlu0 %v318, 12
        %v829 = vpop.permute.xlu0 %828
        %830 = vrot.lane.b32.xlu0 %v394, 12
        %v831 = vpop.permute.xlu0 %830
        %832 = vrot.lane.b32.xlu0 %v321, 12
        %v833 = vpop.permute.xlu0 %832
        %834 = vrot.lane.b32.xlu0 %v395, 12
        %v835 = vpop.permute.xlu0 %834
        %836 = vrot.lane.b32.xlu0 %v324, 12
        %v837 = vpop.permute.xlu0 %836
        %838 = vrot.lane.b32.xlu0 %v396, 12
        %v839 = vpop.permute.xlu0 %838
        %840 = vrot.lane.b32.xlu0 %v327, 12
        %v841 = vpop.permute.xlu0 %840
        %842 = vrot.lane.b32.xlu0 %v397, 12
        %v843 = vpop.permute.xlu0 %842
        %844 = vrot.lane.b32.xlu0 %v330, 12
        %v845 = vpop.permute.xlu0 %844
        %846 = vrot.lane.b32.xlu0 %v398, 12
        %v847 = vpop.permute.xlu0 %846
        %848 = vrot.lane.b32.xlu0 %v333, 12
        %v849 = vpop.permute.xlu0 %848
        %850 = vrot.lane.b32.xlu0 %v399, 12
        %v851 = vpop.permute.xlu0 %850
        %852 = vrot.lane.b32.xlu0 %v336, 12
        %v853 = vpop.permute.xlu0 %852
        %v887 = vrot.slane %v399, 1
        %v888 = vrot.slane %v336, 1
        %v889 = vsel %vm447, %v887, %v888
        %v890 = vrot.slane %v415, 1
        %v891 = vsel %vm447, %v888, %v890
        %892 = vrot.lane.b32.xlu0 %v452, 16
        %v893 = vpop.permute.xlu0 %892
        %894 = vrot.lane.b32.xlu0 %v454, 16
        %v895 = vpop.permute.xlu0 %894
        %896 = vrot.lane.b32.xlu0 %v457, 16
        %v897 = vpop.permute.xlu0 %896
        %898 = vrot.lane.b32.xlu0 %v459, 16
        %v899 = vpop.permute.xlu0 %898
        %900 = vrot.lane.b32.xlu0 %v462, 16
        %v901 = vpop.permute.xlu0 %900
        %902 = vrot.lane.b32.xlu0 %v464, 16
        %v903 = vpop.permute.xlu0 %902
        %904 = vrot.lane.b32.xlu0 %v467, 16
        %v905 = vpop.permute.xlu0 %904
        %906 = vrot.lane.b32.xlu0 %v469, 16
        %v907 = vpop.permute.xlu0 %906
        %908 = vrot.lane.b32.xlu0 %v472, 16
        %v909 = vpop.permute.xlu0 %908
        %910 = vrot.lane.b32.xlu0 %v474, 16
        %v911 = vpop.permute.xlu0 %910
        %912 = vrot.lane.b32.xlu0 %v477, 16
        %v913 = vpop.permute.xlu0 %912
        %914 = vrot.lane.b32.xlu0 %v479, 16
        %v915 = vpop.permute.xlu0 %914
        %916 = vrot.lane.b32.xlu0 %v482, 16
        %v917 = vpop.permute.xlu0 %916
        %918 = vrot.lane.b32.xlu0 %v484, 16
        %v919 = vpop.permute.xlu0 %918
        %920 = vrot.lane.b32.xlu0 %v487, 16
        %v921 = vpop.permute.xlu0 %920
        %922 = vrot.lane.b32.xlu0 %v489, 16
        %v923 = vpop.permute.xlu0 %922
        %924 = vrot.lane.b32.xlu0 %v492, 16
        %v925 = vpop.permute.xlu0 %924
        %926 = vrot.lane.b32.xlu0 %v494, 16
        %v927 = vpop.permute.xlu0 %926
        %928 = vrot.lane.b32.xlu0 %v497, 16
        %v929 = vpop.permute.xlu0 %928
        %930 = vrot.lane.b32.xlu0 %v499, 16
        %v931 = vpop.permute.xlu0 %930
        %932 = vrot.lane.b32.xlu0 %v502, 16
        %v933 = vpop.permute.xlu0 %932
        %934 = vrot.lane.b32.xlu0 %v504, 16
        %v935 = vpop.permute.xlu0 %934
        %936 = vrot.lane.b32.xlu0 %v507, 16
        %v937 = vpop.permute.xlu0 %936
        %938 = vrot.lane.b32.xlu0 %v509, 16
        %v939 = vpop.permute.xlu0 %938
        %940 = vrot.lane.b32.xlu0 %v512, 16
        %v941 = vpop.permute.xlu0 %940
        %942 = vrot.lane.b32.xlu0 %v514, 16
        %v943 = vpop.permute.xlu0 %942
        %944 = vrot.lane.b32.xlu0 %v517, 16
        %v945 = vpop.permute.xlu0 %944
        %946 = vrot.lane.b32.xlu0 %v519, 16
        %v947 = vpop.permute.xlu0 %946
        %948 = vrot.lane.b32.xlu0 %v522, 16
        %v949 = vpop.permute.xlu0 %948
        %950 = vrot.lane.b32.xlu0 %v524, 16
        %v951 = vpop.permute.xlu0 %950
        %952 = vrot.lane.b32.xlu0 %v889, 16
        %v953 = vpop.permute.xlu0 %952
        %954 = vrot.lane.b32.xlu0 %v891, 16
        %v955 = vpop.permute.xlu0 %954
        %v988 = vrot.slane %v399, 2
        %v989 = vrot.slane %v336, 2
        %v990 = vsel %vm618, %v988, %v989
        %v991 = vrot.slane %v415, 2
        %v992 = vsel %vm618, %v989, %v991
        %993 = vrot.lane.b32.xlu0 %v623, 20
        %v994 = vpop.permute.xlu0 %993
        %995 = vrot.lane.b32.xlu0 %v625, 20
        %v996 = vpop.permute.xlu0 %995
        %997 = vrot.lane.b32.xlu0 %v628, 20
        %v998 = vpop.permute.xlu0 %997
        %999 = vrot.lane.b32.xlu0 %v630, 20
        %v1000 = vpop.permute.xlu0 %999
        %1001 = vrot.lane.b32.xlu0 %v633, 20
        %v1002 = vpop.permute.xlu0 %1001
        %1003 = vrot.lane.b32.xlu0 %v635, 20
        %v1004 = vpop.permute.xlu0 %1003
        %1005 = vrot.lane.b32.xlu0 %v638, 20
        %v1006 = vpop.permute.xlu0 %1005
        %1007 = vrot.lane.b32.xlu0 %v640, 20
        %v1008 = vpop.permute.xlu0 %1007
        %1009 = vrot.lane.b32.xlu0 %v643, 20
        %v1010 = vpop.permute.xlu0 %1009
        %1011 = vrot.lane.b32.xlu0 %v645, 20
        %v1012 = vpop.permute.xlu0 %1011
        %1013 = vrot.lane.b32.xlu0 %v648, 20
        %v1014 = vpop.permute.xlu0 %1013
        %1015 = vrot.lane.b32.xlu0 %v650, 20
        %v1016 = vpop.permute.xlu0 %1015
        %1017 = vrot.lane.b32.xlu0 %v653, 20
        %v1018 = vpop.permute.xlu0 %1017
        %1019 = vrot.lane.b32.xlu0 %v655, 20
        %v1020 = vpop.permute.xlu0 %1019
        %1021 = vrot.lane.b32.xlu0 %v658, 20
        %v1022 = vpop.permute.xlu0 %1021
        %1023 = vrot.lane.b32.xlu0 %v660, 20
        %v1024 = vpop.permute.xlu0 %1023
        %1025 = vrot.lane.b32.xlu0 %v663, 20
        %v1026 = vpop.permute.xlu0 %1025
        %1027 = vrot.lane.b32.xlu0 %v665, 20
        %v1028 = vpop.permute.xlu0 %1027
        %1029 = vrot.lane.b32.xlu0 %v668, 20
        %v1030 = vpop.permute.xlu0 %1029
        %1031 = vrot.lane.b32.xlu0 %v670, 20
        %v1032 = vpop.permute.xlu0 %1031
        %1033 = vrot.lane.b32.xlu0 %v673, 20
        %v1034 = vpop.permute.xlu0 %1033
        %1035 = vrot.lane.b32.xlu0 %v675, 20
        %v1036 = vpop.permute.xlu0 %1035
        %1037 = vrot.lane.b32.xlu0 %v678, 20
        %v1038 = vpop.permute.xlu0 %1037
        %1039 = vrot.lane.b32.xlu0 %v680, 20
        %v1040 = vpop.permute.xlu0 %1039
        %1041 = vrot.lane.b32.xlu0 %v683, 20
        %v1042 = vpop.permute.xlu0 %1041
        %1043 = vrot.lane.b32.xlu0 %v685, 20
        %v1044 = vpop.permute.xlu0 %1043
        %1045 = vrot.lane.b32.xlu0 %v688, 20
        %v1046 = vpop.permute.xlu0 %1045
        %1047 = vrot.lane.b32.xlu0 %v690, 20
        %v1048 = vpop.permute.xlu0 %1047
        %1049 = vrot.lane.b32.xlu0 %v693, 20
        %v1050 = vpop.permute.xlu0 %1049
        %1051 = vrot.lane.b32.xlu0 %v695, 20
        %v1052 = vpop.permute.xlu0 %1051
        %1053 = vrot.lane.b32.xlu0 %v990, 20
        %v1054 = vpop.permute.xlu0 %1053
        %1055 = vrot.lane.b32.xlu0 %v992, 20
        %v1056 = vpop.permute.xlu0 %1055
        %1089 = vrot.lane.b32.xlu0 %v385, 24
        %v1090 = vpop.permute.xlu0 %1089
        %1091 = vrot.lane.b32.xlu0 %v294, 24
        %v1092 = vpop.permute.xlu0 %1091
        %1093 = vrot.lane.b32.xlu0 %v386, 24
        %v1094 = vpop.permute.xlu0 %1093
        %1095 = vrot.lane.b32.xlu0 %v297, 24
        %v1096 = vpop.permute.xlu0 %1095
        %1097 = vrot.lane.b32.xlu0 %v387, 24
        %v1098 = vpop.permute.xlu0 %1097
        %1099 = vrot.lane.b32.xlu0 %v300, 24
        %v1100 = vpop.permute.xlu0 %1099
        %1101 = vrot.lane.b32.xlu0 %v388, 24
        %v1102 = vpop.permute.xlu0 %1101
        %1103 = vrot.lane.b32.xlu0 %v303, 24
        %v1104 = vpop.permute.xlu0 %1103
        %1105 = vrot.lane.b32.xlu0 %v389, 24
        %v1106 = vpop.permute.xlu0 %1105
        %1107 = vrot.lane.b32.xlu0 %v306, 24
        %v1108 = vpop.permute.xlu0 %1107
        %1109 = vrot.lane.b32.xlu0 %v390, 24
        %v1110 = vpop.permute.xlu0 %1109
        %1111 = vrot.lane.b32.xlu0 %v309, 24
        %v1112 = vpop.permute.xlu0 %1111
        %1113 = vrot.lane.b32.xlu0 %v391, 24
        %v1114 = vpop.permute.xlu0 %1113
        %1115 = vrot.lane.b32.xlu0 %v312, 24
        %v1116 = vpop.permute.xlu0 %1115
        %1117 = vrot.lane.b32.xlu0 %v392, 24
        %v1118 = vpop.permute.xlu0 %1117
        %1119 = vrot.lane.b32.xlu0 %v315, 24
        %v1120 = vpop.permute.xlu0 %1119
        %1121 = vrot.lane.b32.xlu0 %v393, 24
        %v1122 = vpop.permute.xlu0 %1121
        %1123 = vrot.lane.b32.xlu0 %v318, 24
        %v1124 = vpop.permute.xlu0 %1123
        %1125 = vrot.lane.b32.xlu0 %v394, 24
        %v1126 = vpop.permute.xlu0 %1125
        %1127 = vrot.lane.b32.xlu0 %v321, 24
        %v1128 = vpop.permute.xlu0 %1127
        %1129 = vrot.lane.b32.xlu0 %v395, 24
        %v1130 = vpop.permute.xlu0 %1129
        %1131 = vrot.lane.b32.xlu0 %v324, 24
        %v1132 = vpop.permute.xlu0 %1131
        %1133 = vrot.lane.b32.xlu0 %v396, 24
        %v1134 = vpop.permute.xlu0 %1133
        %1135 = vrot.lane.b32.xlu0 %v327, 24
        %v1136 = vpop.permute.xlu0 %1135
        %1137 = vrot.lane.b32.xlu0 %v397, 24
        %v1138 = vpop.permute.xlu0 %1137
        %1139 = vrot.lane.b32.xlu0 %v330, 24
        %v1140 = vpop.permute.xlu0 %1139
        %1141 = vrot.lane.b32.xlu0 %v398, 24
        %v1142 = vpop.permute.xlu0 %1141
        %1143 = vrot.lane.b32.xlu0 %v333, 24
        %v1144 = vpop.permute.xlu0 %1143
        %1145 = vrot.lane.b32.xlu0 %v399, 24
        %v1146 = vpop.permute.xlu0 %1145
        %1147 = vrot.lane.b32.xlu0 %v336, 24
        %v1148 = vpop.permute.xlu0 %1147
        %1149 = vrot.lane.b32.xlu0 0.0, 24
        %v1150 = vpop.permute.xlu0 %1149
        %1182 = vrot.lane.b32.xlu0 %v457, 28
        %v1183 = vpop.permute.xlu0 %1182
        %1184 = vrot.lane.b32.xlu0 %v459, 28
        %v1185 = vpop.permute.xlu0 %1184
        %1186 = vrot.lane.b32.xlu0 %v462, 28
        %v1187 = vpop.permute.xlu0 %1186
        %1188 = vrot.lane.b32.xlu0 %v464, 28
        %v1189 = vpop.permute.xlu0 %1188
        %1190 = vrot.lane.b32.xlu0 %v467, 28
        %v1191 = vpop.permute.xlu0 %1190
        %1192 = vrot.lane.b32.xlu0 %v469, 28
        %v1193 = vpop.permute.xlu0 %1192
        %1194 = vrot.lane.b32.xlu0 %v472, 28
        %v1195 = vpop.permute.xlu0 %1194
        %1196 = vrot.lane.b32.xlu0 %v474, 28
        %v1197 = vpop.permute.xlu0 %1196
        %1198 = vrot.lane.b32.xlu0 %v477, 28
        %v1199 = vpop.permute.xlu0 %1198
        %1200 = vrot.lane.b32.xlu0 %v479, 28
        %v1201 = vpop.permute.xlu0 %1200
        %1202 = vrot.lane.b32.xlu0 %v482, 28
        %v1203 = vpop.permute.xlu0 %1202
        %1204 = vrot.lane.b32.xlu0 %v484, 28
        %v1205 = vpop.permute.xlu0 %1204
        %1206 = vrot.lane.b32.xlu0 %v487, 28
        %v1207 = vpop.permute.xlu0 %1206
        %1208 = vrot.lane.b32.xlu0 %v489, 28
        %v1209 = vpop.permute.xlu0 %1208
        %1210 = vrot.lane.b32.xlu0 %v492, 28
        %v1211 = vpop.permute.xlu0 %1210
        %1212 = vrot.lane.b32.xlu0 %v494, 28
        %v1213 = vpop.permute.xlu0 %1212
        %1214 = vrot.lane.b32.xlu0 %v497, 28
        %v1215 = vpop.permute.xlu0 %1214
        %1216 = vrot.lane.b32.xlu0 %v499, 28
        %v1217 = vpop.permute.xlu0 %1216
        %1218 = vrot.lane.b32.xlu0 %v502, 28
        %v1219 = vpop.permute.xlu0 %1218
        %1220 = vrot.lane.b32.xlu0 %v504, 28
        %v1221 = vpop.permute.xlu0 %1220
        %1222 = vrot.lane.b32.xlu0 %v507, 28
        %v1223 = vpop.permute.xlu0 %1222
        %1224 = vrot.lane.b32.xlu0 %v509, 28
        %v1225 = vpop.permute.xlu0 %1224
        %1226 = vrot.lane.b32.xlu0 %v512, 28
        %v1227 = vpop.permute.xlu0 %1226
        %1228 = vrot.lane.b32.xlu0 %v514, 28
        %v1229 = vpop.permute.xlu0 %1228
        %1230 = vrot.lane.b32.xlu0 %v517, 28
        %v1231 = vpop.permute.xlu0 %1230
        %1232 = vrot.lane.b32.xlu0 %v519, 28
        %v1233 = vpop.permute.xlu0 %1232
        %1234 = vrot.lane.b32.xlu0 %v522, 28
        %v1235 = vpop.permute.xlu0 %1234
        %1236 = vrot.lane.b32.xlu0 %v524, 28
        %v1237 = vpop.permute.xlu0 %1236
        %1238 = vrot.lane.b32.xlu0 %v889, 28
        %v1239 = vpop.permute.xlu0 %1238
        %1240 = vrot.lane.b32.xlu0 %v891, 28
        %v1241 = vpop.permute.xlu0 %1240
        %1242 = vrot.lane.b32.xlu0 %v449, 28
        %v1243 = vpop.permute.xlu0 %1242
        %1275 = vrot.lane.b32.xlu0 %v628, 32
        %v1276 = vpop.permute.xlu0 %1275
        %1277 = vrot.lane.b32.xlu0 %v630, 32
        %v1278 = vpop.permute.xlu0 %1277
        %1279 = vrot.lane.b32.xlu0 %v633, 32
        %v1280 = vpop.permute.xlu0 %1279
        %1281 = vrot.lane.b32.xlu0 %v635, 32
        %v1282 = vpop.permute.xlu0 %1281
        %1283 = vrot.lane.b32.xlu0 %v638, 32
        %v1284 = vpop.permute.xlu0 %1283
        %1285 = vrot.lane.b32.xlu0 %v640, 32
        %v1286 = vpop.permute.xlu0 %1285
        %1287 = vrot.lane.b32.xlu0 %v643, 32
        %v1288 = vpop.permute.xlu0 %1287
        %1289 = vrot.lane.b32.xlu0 %v645, 32
        %v1290 = vpop.permute.xlu0 %1289
        %1291 = vrot.lane.b32.xlu0 %v648, 32
        %v1292 = vpop.permute.xlu0 %1291
        %1293 = vrot.lane.b32.xlu0 %v650, 32
        %v1294 = vpop.permute.xlu0 %1293
        %1295 = vrot.lane.b32.xlu0 %v653, 32
        %v1296 = vpop.permute.xlu0 %1295
        %1297 = vrot.lane.b32.xlu0 %v655, 32
        %v1298 = vpop.permute.xlu0 %1297
        %1299 = vrot.lane.b32.xlu0 %v658, 32
        %v1300 = vpop.permute.xlu0 %1299
        %1301 = vrot.lane.b32.xlu0 %v660, 32
        %v1302 = vpop.permute.xlu0 %1301
        %1303 = vrot.lane.b32.xlu0 %v663, 32
        %v1304 = vpop.permute.xlu0 %1303
        %1305 = vrot.lane.b32.xlu0 %v665, 32
        %v1306 = vpop.permute.xlu0 %1305
        %1307 = vrot.lane.b32.xlu0 %v668, 32
        %v1308 = vpop.permute.xlu0 %1307
        %1309 = vrot.lane.b32.xlu0 %v670, 32
        %v1310 = vpop.permute.xlu0 %1309
        %1311 = vrot.lane.b32.xlu0 %v673, 32
        %v1312 = vpop.permute.xlu0 %1311
        %1313 = vrot.lane.b32.xlu0 %v675, 32
        %v1314 = vpop.permute.xlu0 %1313
        %1315 = vrot.lane.b32.xlu0 %v678, 32
        %v1316 = vpop.permute.xlu0 %1315
        %1317 = vrot.lane.b32.xlu0 %v680, 32
        %v1318 = vpop.permute.xlu0 %1317
        %1319 = vrot.lane.b32.xlu0 %v683, 32
        %v1320 = vpop.permute.xlu0 %1319
        %1321 = vrot.lane.b32.xlu0 %v685, 32
        %v1322 = vpop.permute.xlu0 %1321
        %1323 = vrot.lane.b32.xlu0 %v688, 32
        %v1324 = vpop.permute.xlu0 %1323
        %1325 = vrot.lane.b32.xlu0 %v690, 32
        %v1326 = vpop.permute.xlu0 %1325
        %1327 = vrot.lane.b32.xlu0 %v693, 32
        %v1328 = vpop.permute.xlu0 %1327
        %1329 = vrot.lane.b32.xlu0 %v695, 32
        %v1330 = vpop.permute.xlu0 %1329
        %1331 = vrot.lane.b32.xlu0 %v990, 32
        %v1332 = vpop.permute.xlu0 %1331
        %1333 = vrot.lane.b32.xlu0 %v992, 32
        %v1334 = vpop.permute.xlu0 %1333
        %1335 = vrot.lane.b32.xlu0 %v620, 32
        %v1336 = vpop.permute.xlu0 %1335
        %vm1368 = vcmask 31744
        %v1369 = vsel %vm1368, 0.0, %v526
        %v1370 = vsel %vm1368, %v384, %v528
        %v1371 = vsel %vm1368, %v291, %v530
        %v1372 = vsel %vm1368, %v385, %v532
        %v1373 = vsel %vm1368, %v294, %v534
        %v1374 = vsel %vm1368, %v386, %v536
        %v1375 = vsel %vm1368, %v297, %v538
        %v1376 = vsel %vm1368, %v387, %v540
        %v1377 = vsel %vm1368, %v300, %v542
        %v1378 = vsel %vm1368, %v388, %v544
        %v1379 = vsel %vm1368, %v303, %v546
        %v1380 = vsel %vm1368, %v389, %v548
        %v1381 = vsel %vm1368, %v306, %v550
        %v1382 = vsel %vm1368, %v390, %v552
        %v1383 = vsel %vm1368, %v309, %v554
        %v1384 = vsel %vm1368, %v391, %v556
        %v1385 = vsel %vm1368, %v312, %v558
        %v1386 = vsel %vm1368, %v392, %v560
        %v1387 = vsel %vm1368, %v315, %v562
        %v1388 = vsel %vm1368, %v393, %v564
        %v1389 = vsel %vm1368, %v318, %v566
        %v1390 = vsel %vm1368, %v394, %v568
        %v1391 = vsel %vm1368, %v321, %v570
        %v1392 = vsel %vm1368, %v395, %v572
        %v1393 = vsel %vm1368, %v324, %v574
        %v1394 = vsel %vm1368, %v396, %v576
        %v1395 = vsel %vm1368, %v327, %v578
        %v1396 = vsel %vm1368, %v397, %v580
        %v1397 = vsel %vm1368, %v330, %v582
        %v1398 = vsel %vm1368, %v398, %v584
        %v1399 = vsel %vm1368, %v333, %v586
        %vm1400 = vcmask 64512
        %v1401 = vsel %vm1400, %v1369, %v697
        %v1402 = vsel %vm1400, %v1370, %v699
        %v1403 = vsel %vm1400, %v1371, %v701
        %v1404 = vsel %vm1400, %v1372, %v703
        %v1405 = vsel %vm1400, %v1373, %v705
        %v1406 = vsel %vm1400, %v1374, %v707
        %v1407 = vsel %vm1400, %v1375, %v709
        %v1408 = vsel %vm1400, %v1376, %v711
        %v1409 = vsel %vm1400, %v1377, %v713
        %v1410 = vsel %vm1400, %v1378, %v715
        %v1411 = vsel %vm1400, %v1379, %v717
        %v1412 = vsel %vm1400, %v1380, %v719
        %v1413 = vsel %vm1400, %v1381, %v721
        %v1414 = vsel %vm1400, %v1382, %v723
        %v1415 = vsel %vm1400, %v1383, %v725
        %v1416 = vsel %vm1400, %v1384, %v727
        %v1417 = vsel %vm1400, %v1385, %v729
        %v1418 = vsel %vm1400, %v1386, %v731
        %v1419 = vsel %vm1400, %v1387, %v733
        %v1420 = vsel %vm1400, %v1388, %v735
        %v1421 = vsel %vm1400, %v1389, %v737
        %v1422 = vsel %vm1400, %v1390, %v739
        %v1423 = vsel %vm1400, %v1391, %v741
        %v1424 = vsel %vm1400, %v1392, %v743
        %v1425 = vsel %vm1400, %v1393, %v745
        %v1426 = vsel %vm1400, %v1394, %v747
        %v1427 = vsel %vm1400, %v1395, %v749
        %v1428 = vsel %vm1400, %v1396, %v751
        %v1429 = vsel %vm1400, %v1397, %v753
        %v1430 = vsel %vm1400, %v1398, %v755
        %v1431 = vsel %vm1400, %v1399, %v757
        %vm1432 = vcmask 97280
        %v1433 = vsel %vm1432, %v1401, %v791
        %v1434 = vsel %vm1432, %v1401, %v793
        %v1435 = vsel %vm1432, %v1402, %v795
        %v1436 = vsel %vm1432, %v1403, %v797
        %v1437 = vsel %vm1432, %v1404, %v799
        %v1438 = vsel %vm1432, %v1405, %v801
        %v1439 = vsel %vm1432, %v1406, %v803
        %v1440 = vsel %vm1432, %v1407, %v805
        %v1441 = vsel %vm1432, %v1408, %v807
        %v1442 = vsel %vm1432, %v1409, %v809
        %v1443 = vsel %vm1432, %v1410, %v811
        %v1444 = vsel %vm1432, %v1411, %v813
        %v1445 = vsel %vm1432, %v1412, %v815
        %v1446 = vsel %vm1432, %v1413, %v817
        %v1447 = vsel %vm1432, %v1414, %v819
        %v1448 = vsel %vm1432, %v1415, %v821
        %v1449 = vsel %vm1432, %v1416, %v823
        %v1450 = vsel %vm1432, %v1417, %v825
        %v1451 = vsel %vm1432, %v1418, %v827
        %v1452 = vsel %vm1432, %v1419, %v829
        %v1453 = vsel %vm1432, %v1420, %v831
        %v1454 = vsel %vm1432, %v1421, %v833
        %v1455 = vsel %vm1432, %v1422, %v835
        %v1456 = vsel %vm1432, %v1423, %v837
        %v1457 = vsel %vm1432, %v1424, %v839
        %v1458 = vsel %vm1432, %v1425, %v841
        %v1459 = vsel %vm1432, %v1426, %v843
        %v1460 = vsel %vm1432, %v1427, %v845
        %v1461 = vsel %vm1432, %v1428, %v847
        %v1462 = vsel %vm1432, %v1429, %v849
        %v1463 = vsel %vm1432, %v1430, %v851
        %v1464 = vsel %vm1432, %v1431, %v853
        %vm1465 = vcmask 130048
        %v1466 = vsel %vm1465, %v1433, %v893
        %v1467 = vsel %vm1465, %v1434, %v895
        %v1468 = vsel %vm1465, %v1435, %v897
        %v1469 = vsel %vm1465, %v1436, %v899
        %v1470 = vsel %vm1465, %v1437, %v901
        %v1471 = vsel %vm1465, %v1438, %v903
        %v1472 = vsel %vm1465, %v1439, %v905
        %v1473 = vsel %vm1465, %v1440, %v907
        %v1474 = vsel %vm1465, %v1441, %v909
        %v1475 = vsel %vm1465, %v1442, %v911
        %v1476 = vsel %vm1465, %v1443, %v913
        %v1477 = vsel %vm1465, %v1444, %v915
        %v1478 = vsel %vm1465, %v1445, %v917
        %v1479 = vsel %vm1465, %v1446, %v919
        %v1480 = vsel %vm1465, %v1447, %v921
        %v1481 = vsel %vm1465, %v1448, %v923
        %v1482 = vsel %vm1465, %v1449, %v925
        %v1483 = vsel %vm1465, %v1450, %v927
        %v1484 = vsel %vm1465, %v1451, %v929
        %v1485 = vsel %vm1465, %v1452, %v931
        %v1486 = vsel %vm1465, %v1453, %v933
        %v1487 = vsel %vm1465, %v1454, %v935
        %v1488 = vsel %vm1465, %v1455, %v937
        %v1489 = vsel %vm1465, %v1456, %v939
        %v1490 = vsel %vm1465, %v1457, %v941
        %v1491 = vsel %vm1465, %v1458, %v943
        %v1492 = vsel %vm1465, %v1459, %v945
        %v1493 = vsel %vm1465, %v1460, %v947
        %v1494 = vsel %vm1465, %v1461, %v949
        %v1495 = vsel %vm1465, %v1462, %v951
        %v1496 = vsel %vm1465, %v1463, %v953
        %v1497 = vsel %vm1465, %v1464, %v955
        %vm1498 = vcmask 162816
        %v1499 = vsel %vm1498, %v1466, %v994
        %v1500 = vsel %vm1498, %v1467, %v996
        %v1501 = vsel %vm1498, %v1468, %v998
        %v1502 = vsel %vm1498, %v1469, %v1000
        %v1503 = vsel %vm1498, %v1470, %v1002
        %v1504 = vsel %vm1498, %v1471, %v1004
        %v1505 = vsel %vm1498, %v1472, %v1006
        %v1506 = vsel %vm1498, %v1473, %v1008
        %v1507 = vsel %vm1498, %v1474, %v1010
        %v1508 = vsel %vm1498, %v1475, %v1012
        %v1509 = vsel %vm1498, %v1476, %v1014
        %v1510 = vsel %vm1498, %v1477, %v1016
        %v1511 = vsel %vm1498, %v1478, %v1018
        %v1512 = vsel %vm1498, %v1479, %v1020
        %v1513 = vsel %vm1498, %v1480, %v1022
        %v1514 = vsel %vm1498, %v1481, %v1024
        %v1515 = vsel %vm1498, %v1482, %v1026
        %v1516 = vsel %vm1498, %v1483, %v1028
        %v1517 = vsel %vm1498, %v1484, %v1030
        %v1518 = vsel %vm1498, %v1485, %v1032
        %v1519 = vsel %vm1498, %v1486, %v1034
        %v1520 = vsel %vm1498, %v1487, %v1036
        %v1521 = vsel %vm1498, %v1488, %v1038
        %v1522 = vsel %vm1498, %v1489, %v1040
        %v1523 = vsel %vm1498, %v1490, %v1042
        %v1524 = vsel %vm1498, %v1491, %v1044
        %v1525 = vsel %vm1498, %v1492, %v1046
        %v1526 = vsel %vm1498, %v1493, %v1048
        %v1527 = vsel %vm1498, %v1494, %v1050
        %v1528 = vsel %vm1498, %v1495, %v1052
        %v1529 = vsel %vm1498, %v1496, %v1054
        %v1530 = vsel %vm1498, %v1497, %v1056
        %vm1531 = vcmask 195584
        %v1532 = vsel %vm1531, %v1499, %v1090
        %v1533 = vsel %vm1531, %v1500, %v1092
        %v1534 = vsel %vm1531, %v1501, %v1094
        %v1535 = vsel %vm1531, %v1502, %v1096
        %v1536 = vsel %vm1531, %v1503, %v1098
        %v1537 = vsel %vm1531, %v1504, %v1100
        %v1538 = vsel %vm1531, %v1505, %v1102
        %v1539 = vsel %vm1531, %v1506, %v1104
        %v1540 = vsel %vm1531, %v1507, %v1106
        %v1541 = vsel %vm1531, %v1508, %v1108
        %v1542 = vsel %vm1531, %v1509, %v1110
        %v1543 = vsel %vm1531, %v1510, %v1112
        %v1544 = vsel %vm1531, %v1511, %v1114
        %v1545 = vsel %vm1531, %v1512, %v1116
        %v1546 = vsel %vm1531, %v1513, %v1118
        %v1547 = vsel %vm1531, %v1514, %v1120
        %v1548 = vsel %vm1531, %v1515, %v1122
        %v1549 = vsel %vm1531, %v1516, %v1124
        %v1550 = vsel %vm1531, %v1517, %v1126
        %v1551 = vsel %vm1531, %v1518, %v1128
        %v1552 = vsel %vm1531, %v1519, %v1130
        %v1553 = vsel %vm1531, %v1520, %v1132
        %v1554 = vsel %vm1531, %v1521, %v1134
        %v1555 = vsel %vm1531, %v1522, %v1136
        %v1556 = vsel %vm1531, %v1523, %v1138
        %v1557 = vsel %vm1531, %v1524, %v1140
        %v1558 = vsel %vm1531, %v1525, %v1142
        %v1559 = vsel %vm1531, %v1526, %v1144
        %v1560 = vsel %vm1531, %v1527, %v1146
        %v1561 = vsel %vm1531, %v1528, %v1148
        %v1562 = vsel %vm1531, %v1529, %v1150
        %v1563 = vsel %vm1531, %v1530, %v1150
        %vm1564 = vcmask 228352
        %v1565 = vsel %vm1564, %v1532, %v1183
        %v1566 = vsel %vm1564, %v1533, %v1185
        %v1567 = vsel %vm1564, %v1534, %v1187
        %v1568 = vsel %vm1564, %v1535, %v1189
        %v1569 = vsel %vm1564, %v1536, %v1191
        %v1570 = vsel %vm1564, %v1537, %v1193
        %v1571 = vsel %vm1564, %v1538, %v1195
        %v1572 = vsel %vm1564, %v1539, %v1197
        %v1573 = vsel %vm1564, %v1540, %v1199
        %v1574 = vsel %vm1564, %v1541, %v1201
        %v1575 = vsel %vm1564, %v1542, %v1203
        %v1576 = vsel %vm1564, %v1543, %v1205
        %v1577 = vsel %vm1564, %v1544, %v1207
        %v1578 = vsel %vm1564, %v1545, %v1209
        %v1579 = vsel %vm1564, %v1546, %v1211
        %v1580 = vsel %vm1564, %v1547, %v1213
        %v1581 = vsel %vm1564, %v1548, %v1215
        %v1582 = vsel %vm1564, %v1549, %v1217
        %v1583 = vsel %vm1564, %v1550, %v1219
        %v1584 = vsel %vm1564, %v1551, %v1221
        %v1585 = vsel %vm1564, %v1552, %v1223
        %v1586 = vsel %vm1564, %v1553, %v1225
        %v1587 = vsel %vm1564, %v1554, %v1227
        %v1588 = vsel %vm1564, %v1555, %v1229
        %v1589 = vsel %vm1564, %v1556, %v1231
        %v1590 = vsel %vm1564, %v1557, %v1233
        %v1591 = vsel %vm1564, %v1558, %v1235
        %v1592 = vsel %vm1564, %v1559, %v1237
        %v1593 = vsel %vm1564, %v1560, %v1239
        %v1594 = vsel %vm1564, %v1561, %v1241
        %v1595 = vsel %vm1564, %v1562, %v1243
        %v1596 = vsel %vm1564, %v1563, %v1243
        %vm1597 = vcmask 261120
        %v1598 = vsel %vm1597, %v1565, %v1276
        %v1599 = vsel %vm1597, %v1566, %v1278
        %v1600 = vsel %vm1597, %v1567, %v1280
        %v1601 = vsel %vm1597, %v1568, %v1282
        %v1602 = vsel %vm1597, %v1569, %v1284
        %v1603 = vsel %vm1597, %v1570, %v1286
        %v1604 = vsel %vm1597, %v1571, %v1288
        %v1605 = vsel %vm1597, %v1572, %v1290
        %v1606 = vsel %vm1597, %v1573, %v1292
        %v1607 = vsel %vm1597, %v1574, %v1294
        %v1608 = vsel %vm1597, %v1575, %v1296
        %v1609 = vsel %vm1597, %v1576, %v1298
        %v1610 = vsel %vm1597, %v1577, %v1300
        %v1611 = vsel %vm1597, %v1578, %v1302
        %v1612 = vsel %vm1597, %v1579, %v1304
        %v1613 = vsel %vm1597, %v1580, %v1306
        %v1614 = vsel %vm1597, %v1581, %v1308
        %v1615 = vsel %vm1597, %v1582, %v1310
        %v1616 = vsel %vm1597, %v1583, %v1312
        %v1617 = vsel %vm1597, %v1584, %v1314
        %v1618 = vsel %vm1597, %v1585, %v1316
        %v1619 = vsel %vm1597, %v1586, %v1318
        %v1620 = vsel %vm1597, %v1587, %v1320
        %v1621 = vsel %vm1597, %v1588, %v1322
        %v1622 = vsel %vm1597, %v1589, %v1324
        %v1623 = vsel %vm1597, %v1590, %v1326
        %v1624 = vsel %vm1597, %v1591, %v1328
        %v1625 = vsel %vm1597, %v1592, %v1330
        %v1626 = vsel %vm1597, %v1593, %v1332
        %v1627 = vsel %vm1597, %v1594, %v1334
        %v1628 = vsel %vm1597, %v1595, %v1336
        %v1629 = vsel %vm1597, %v1596, %v1336
        %v1630 = vpack.c.bf16 %v1599, %v1598
        %v1631 = vpack.c.bf16 %v1601, %v1600
        %v1632 = vpack.c.bf16 %v1603, %v1602
        %v1633 = vpack.c.bf16 %v1605, %v1604
        %v1634 = vpack.c.bf16 %v1607, %v1606
        %v1635 = vpack.c.bf16 %v1609, %v1608
        %v1636 = vpack.c.bf16 %v1611, %v1610
        %v1637 = vpack.c.bf16 %v1613, %v1612
        %v1638 = vpack.c.bf16 %v1615, %v1614
        %v1639 = vpack.c.bf16 %v1617, %v1616
        %v1640 = vpack.c.bf16 %v1619, %v1618
        %v1641 = vpack.c.bf16 %v1621, %v1620
        %v1642 = vpack.c.bf16 %v1623, %v1622
        %v1643 = vpack.c.bf16 %v1625, %v1624
        %v1644 = vpack.c.bf16 %v1627, %v1626
        %v1645 = vpack.c.bf16 %v1629, %v1628
        %v1646 = vld [vmem:[%s1] sm:$0xf]
        %v1647 = vld [vmem:[%s1 + $0x4] sm:$0xf]
        %v1648 = vld [vmem:[%s1 + $0x8] sm:$0xf]
        %v1649 = vld [vmem:[%s1 + $0xc] sm:$0xf]
        %v1650 = vld [vmem:[%s1 + $0x10] sm:$0x3]
        %v1651 = vld [vmem:[%s2] sm:$0x1]
        %v1653 = vperm.slane %v1651, 0
        %v1660 = vunpack.c.l.b16 %v1646
        %v1661 = vunpack.c.l.b16 %v1647
        %v1662 = vunpack.c.l.b16 %v1648
        %v1663 = vunpack.c.l.b16 %v1649
        %v1664 = vunpack.c.l.b16 %v1650
        %v1665 = vpack.c.b16 %v1661, %v1660
        %v1666 = vpack.c.b16 %v1663, %v1662
        %v1667 = vpack.c.b16 %v1664, %v1664
        %vm1670 = vcmask 293888
        %v1672 = vsel %vm1670, %v1630, 0
        %v1675 = vsel %vm1670, %v1631, 0
        %v1678 = vsel %vm1670, %v1632, 0
        %v1681 = vsel %vm1670, %v1633, 0
        %v1684 = vsel %vm1670, %v1634, 0
        %v1687 = vsel %vm1670, %v1635, 0
        %v1690 = vsel %vm1670, %v1636, 0
        %v1693 = vsel %vm1670, %v1637, 0
        %v1696 = vsel %vm1670, %v1638, 0
        %v1699 = vsel %vm1670, %v1639, 0
        %v1702 = vsel %vm1670, %v1640, 0
        %v1705 = vsel %vm1670, %v1641, 0
        %v1708 = vsel %vm1670, %v1642, 0
        %v1711 = vsel %vm1670, %v1643, 0
        %v1714 = vsel %vm1670, %v1644, 0
        %v1717 = vsel %vm1670, %v1645, 0
        %vm1719 = vcmask 1041408
        %v1721 = vsel %vm1719, %v1667, 0
        %1723 = vmatpush.bf16.msra.mxu0 0
        %1724 = vmatpush.bf16.msra.mxu0 0
        %1725 = vmatpush.bf16.msra.mxu0 0
        %1726 = vmatpush.bf16.msra.mxu0 0
        %1727 = vmatpush.bf16.msra.mxu0 0
        %1728 = vmatpush.bf16.msra.mxu0 %v1721
        %1729 = vmatpush.bf16.msra.mxu0 %v1666
        %1730 = vmatpush.bf16.msra.mxu0 %v1665
        %1731 = vmatmul.bf16.gmra.mxu0 %v1672
        %v1732 = vpop.f32.mrf.mxu0
        %v1733 = vadd.f32 %v1653, %v1732
        %v1734 = vpop.f32.mrf.mxu0
        %v1735 = vadd.f32 %v1653, %v1734
        %1736 = vmatmul.bf16.gmra.mxu0 %v1675
        %v1737 = vpop.f32.mrf.mxu0
        %v1738 = vadd.f32 %v1653, %v1737
        %v1739 = vpop.f32.mrf.mxu0
        %v1740 = vadd.f32 %v1653, %v1739
        %1741 = vmatmul.bf16.gmra.mxu0 %v1678
        %v1742 = vpop.f32.mrf.mxu0
        %v1743 = vadd.f32 %v1653, %v1742
        %v1744 = vpop.f32.mrf.mxu0
        %v1745 = vadd.f32 %v1653, %v1744
        %1746 = vmatmul.bf16.gmra.mxu0 %v1681
        %v1747 = vpop.f32.mrf.mxu0
        %v1748 = vadd.f32 %v1653, %v1747
        %v1749 = vpop.f32.mrf.mxu0
        %v1750 = vadd.f32 %v1653, %v1749
        %1751 = vmatmul.bf16.gmra.mxu0 %v1684
        %v1752 = vpop.f32.mrf.mxu0
        %v1753 = vadd.f32 %v1653, %v1752
        %v1754 = vpop.f32.mrf.mxu0
        %v1755 = vadd.f32 %v1653, %v1754
        %1756 = vmatmul.bf16.gmra.mxu0 %v1687
        %v1757 = vpop.f32.mrf.mxu0
        %v1758 = vadd.f32 %v1653, %v1757
        %v1759 = vpop.f32.mrf.mxu0
        %v1760 = vadd.f32 %v1653, %v1759
        %1761 = vmatmul.bf16.gmra.mxu0 %v1690
        %v1762 = vpop.f32.mrf.mxu0
        %v1763 = vadd.f32 %v1653, %v1762
        %v1764 = vpop.f32.mrf.mxu0
        %v1765 = vadd.f32 %v1653, %v1764
        %1766 = vmatmul.bf16.gmra.mxu0 %v1693
        %v1767 = vpop.f32.mrf.mxu0
        %v1768 = vadd.f32 %v1653, %v1767
        %v1769 = vpop.f32.mrf.mxu0
        %v1770 = vadd.f32 %v1653, %v1769
        %1771 = vmatmul.bf16.gmra.mxu0 %v1696
        %v1772 = vpop.f32.mrf.mxu0
        %v1773 = vadd.f32 %v1653, %v1772
        %v1774 = vpop.f32.mrf.mxu0
        %v1775 = vadd.f32 %v1653, %v1774
        %1776 = vmatmul.bf16.gmra.mxu0 %v1699
        %v1777 = vpop.f32.mrf.mxu0
        %v1778 = vadd.f32 %v1653, %v1777
        %v1779 = vpop.f32.mrf.mxu0
        %v1780 = vadd.f32 %v1653, %v1779
        %1781 = vmatmul.bf16.gmra.mxu0 %v1702
        %v1782 = vpop.f32.mrf.mxu0
        %v1783 = vadd.f32 %v1653, %v1782
        %v1784 = vpop.f32.mrf.mxu0
        %v1785 = vadd.f32 %v1653, %v1784
        %1786 = vmatmul.bf16.gmra.mxu0 %v1705
        %v1787 = vpop.f32.mrf.mxu0
        %v1788 = vadd.f32 %v1653, %v1787
        %v1789 = vpop.f32.mrf.mxu0
        %v1790 = vadd.f32 %v1653, %v1789
        %1791 = vmatmul.bf16.gmra.mxu0 %v1708
        %v1792 = vpop.f32.mrf.mxu0
        %v1793 = vadd.f32 %v1653, %v1792
        %v1794 = vpop.f32.mrf.mxu0
        %v1795 = vadd.f32 %v1653, %v1794
        %1796 = vmatmul.bf16.gmra.mxu0 %v1711
        %v1797 = vpop.f32.mrf.mxu0
        %v1798 = vadd.f32 %v1653, %v1797
        %v1799 = vpop.f32.mrf.mxu0
        %v1800 = vadd.f32 %v1653, %v1799
        %1801 = vmatmul.bf16.gmra.mxu0 %v1714
        %v1802 = vpop.f32.mrf.mxu0
        %v1803 = vadd.f32 %v1653, %v1802
        %v1804 = vpop.f32.mrf.mxu0
        %v1805 = vadd.f32 %v1653, %v1804
        %1806 = vmatmul.bf16.gmra.mxu0 %v1717
        %v1807 = vpop.f32.mrf.mxu0
        %v1808 = vadd.f32 %v1653, %v1807
        %v1809 = vpop.f32.mrf.mxu0
        %v1810 = vadd.f32 %v1653, %v1809
        %1811 = vdwg.mxu0
        %v1812 = vmax.f32 %v1733, 0.0
        %v1813 = vmax.f32 %v1735, 0.0
        %v1814 = vmax.f32 %v1738, 0.0
        %v1815 = vmax.f32 %v1740, 0.0
        %v1816 = vmax.f32 %v1743, 0.0
        %v1817 = vmax.f32 %v1745, 0.0
        %v1818 = vmax.f32 %v1748, 0.0
        %v1819 = vmax.f32 %v1750, 0.0
        %v1820 = vmax.f32 %v1753, 0.0
        %v1821 = vmax.f32 %v1755, 0.0
        %v1822 = vmax.f32 %v1758, 0.0
        %v1823 = vmax.f32 %v1760, 0.0
        %v1824 = vmax.f32 %v1763, 0.0
        %v1825 = vmax.f32 %v1765, 0.0
        %v1826 = vmax.f32 %v1768, 0.0
        %v1827 = vmax.f32 %v1770, 0.0
        %v1828 = vmax.f32 %v1773, 0.0
        %v1829 = vmax.f32 %v1775, 0.0
        %v1830 = vmax.f32 %v1778, 0.0
        %v1831 = vmax.f32 %v1780, 0.0
        %v1832 = vmax.f32 %v1783, 0.0
        %v1833 = vmax.f32 %v1785, 0.0
        %v1834 = vmax.f32 %v1788, 0.0
        %v1835 = vmax.f32 %v1790, 0.0
        %v1836 = vmax.f32 %v1793, 0.0
        %v1837 = vmax.f32 %v1795, 0.0
        %v1838 = vmax.f32 %v1798, 0.0
        %v1839 = vmax.f32 %v1800, 0.0
        %v1840 = vmax.f32 %v1803, 0.0
        %v1841 = vmax.f32 %v1805, 0.0
        %v1842 = vmax.f32 %v1808, 0.0
        %v1843 = vmax.f32 %v1810, 0.0
        %v1876 = vrot.slane %v1812, 7
        %v1877 = vrot.slane %v1813, 7
        %v1878 = vsel %vm288, %v1876, %v1877
        %v1879 = vrot.slane %v1814, 7
        %v1880 = vrot.slane %v1815, 7
        %v1881 = vsel %vm288, %v1879, %v1880
        %v1882 = vrot.slane %v1816, 7
        %v1883 = vrot.slane %v1817, 7
        %v1884 = vsel %vm288, %v1882, %v1883
        %v1885 = vrot.slane %v1818, 7
        %v1886 = vrot.slane %v1819, 7
        %v1887 = vsel %vm288, %v1885, %v1886
        %v1888 = vrot.slane %v1820, 7
        %v1889 = vrot.slane %v1821, 7
        %v1890 = vsel %vm288, %v1888, %v1889
        %v1891 = vrot.slane %v1822, 7
        %v1892 = vrot.slane %v1823, 7
        %v1893 = vsel %vm288, %v1891, %v1892
        %v1894 = vrot.slane %v1824, 7
        %v1895 = vrot.slane %v1825, 7
        %v1896 = vsel %vm288, %v1894, %v1895
        %v1897 = vrot.slane %v1826, 7
        %v1898 = vrot.slane %v1827, 7
        %v1899 = vsel %vm288, %v1897, %v1898
        %v1900 = vrot.slane %v1828, 7
        %v1901 = vrot.slane %v1829, 7
        %v1902 = vsel %vm288, %v1900, %v1901
        %v1903 = vrot.slane %v1830, 7
        %v1904 = vrot.slane %v1831, 7
        %v1905 = vsel %vm288, %v1903, %v1904
        %v1906 = vrot.slane %v1832, 7
        %v1907 = vrot.slane %v1833, 7
        %v1908 = vsel %vm288, %v1906, %v1907
        %v1909 = vrot.slane %v1834, 7
        %v1910 = vrot.slane %v1835, 7
        %v1911 = vsel %vm288, %v1909, %v1910
        %v1912 = vrot.slane %v1836, 7
        %v1913 = vrot.slane %v1837, 7
        %v1914 = vsel %vm288, %v1912, %v1913
        %v1915 = vrot.slane %v1838, 7
        %v1916 = vrot.slane %v1839, 7
        %v1917 = vsel %vm288, %v1915, %v1916
        %v1918 = vrot.slane %v1840, 7
        %v1919 = vrot.slane %v1841, 7
        %v1920 = vsel %vm288, %v1918, %v1919
        %v1921 = vrot.slane %v1842, 7
        %v1922 = vrot.slane %v1843, 7
        %v1923 = vsel %vm288, %v1921, %v1922
        %v1971 = vsel %vm288, 0.0, %v1876
        %v1972 = vsel %vm288, 0.0, %v1879
        %v1973 = vsel %vm288, 0.0, %v1882
        %v1974 = vsel %vm288, 0.0, %v1885
        %v1975 = vsel %vm288, 0.0, %v1888
        %v1976 = vsel %vm288, 0.0, %v1891
        %v1977 = vsel %vm288, 0.0, %v1894
        %v1978 = vsel %vm288, 0.0, %v1897
        %v1979 = vsel %vm288, 0.0, %v1900
        %v1980 = vsel %vm288, 0.0, %v1903
        %v1981 = vsel %vm288, 0.0, %v1906
        %v1982 = vsel %vm288, 0.0, %v1909
        %v1983 = vsel %vm288, 0.0, %v1912
        %v1984 = vsel %vm288, 0.0, %v1915
        %v1985 = vsel %vm288, 0.0, %v1918
        %v1986 = vsel %vm288, 0.0, %v1921
        %v1987 = vsel %vm288, %v1877, 0.0
        %v1988 = vsel %vm288, %v1880, 0.0
        %v1989 = vsel %vm288, %v1883, 0.0
        %v1990 = vsel %vm288, %v1886, 0.0
        %v1991 = vsel %vm288, %v1889, 0.0
        %v1992 = vsel %vm288, %v1892, 0.0
        %v1993 = vsel %vm288, %v1895, 0.0
        %v1994 = vsel %vm288, %v1898, 0.0
        %v1995 = vsel %vm288, %v1901, 0.0
        %v1996 = vsel %vm288, %v1904, 0.0
        %v1997 = vsel %vm288, %v1907, 0.0
        %v1998 = vsel %vm288, %v1910, 0.0
        %v1999 = vsel %vm288, %v1913, 0.0
        %v2000 = vsel %vm288, %v1916, 0.0
        %v2001 = vsel %vm288, %v1919, 0.0
        %v2002 = vsel %vm288, %v1922, 0.0
        %v2033 = vrot.slane %v1971, 1
        %v2034 = vrot.slane %v1878, 1
        %v2035 = vsel %vm447, %v2033, %v2034
        %v2036 = vrot.slane %v1987, 1
        %v2037 = vsel %vm447, %v2034, %v2036
        %v2038 = vrot.slane %v1972, 1
        %v2039 = vrot.slane %v1881, 1
        %v2040 = vsel %vm447, %v2038, %v2039
        %v2041 = vrot.slane %v1988, 1
        %v2042 = vsel %vm447, %v2039, %v2041
        %v2043 = vrot.slane %v1973, 1
        %v2044 = vrot.slane %v1884, 1
        %v2045 = vsel %vm447, %v2043, %v2044
        %v2046 = vrot.slane %v1989, 1
        %v2047 = vsel %vm447, %v2044, %v2046
        %v2048 = vrot.slane %v1974, 1
        %v2049 = vrot.slane %v1887, 1
        %v2050 = vsel %vm447, %v2048, %v2049
        %v2051 = vrot.slane %v1990, 1
        %v2052 = vsel %vm447, %v2049, %v2051
        %v2053 = vrot.slane %v1975, 1
        %v2054 = vrot.slane %v1890, 1
        %v2055 = vsel %vm447, %v2053, %v2054
        %v2056 = vrot.slane %v1991, 1
        %v2057 = vsel %vm447, %v2054, %v2056
        %v2058 = vrot.slane %v1976, 1
        %v2059 = vrot.slane %v1893, 1
        %v2060 = vsel %vm447, %v2058, %v2059
        %v2061 = vrot.slane %v1992, 1
        %v2062 = vsel %vm447, %v2059, %v2061
        %v2063 = vrot.slane %v1977, 1
        %v2064 = vrot.slane %v1896, 1
        %v2065 = vsel %vm447, %v2063, %v2064
        %v2066 = vrot.slane %v1993, 1
        %v2067 = vsel %vm447, %v2064, %v2066
        %v2068 = vrot.slane %v1978, 1
        %v2069 = vrot.slane %v1899, 1
        %v2070 = vsel %vm447, %v2068, %v2069
        %v2071 = vrot.slane %v1994, 1
        %v2072 = vsel %vm447, %v2069, %v2071
        %v2073 = vrot.slane %v1979, 1
        %v2074 = vrot.slane %v1902, 1
        %v2075 = vsel %vm447, %v2073, %v2074
        %v2076 = vrot.slane %v1995, 1
        %v2077 = vsel %vm447, %v2074, %v2076
        %v2078 = vrot.slane %v1980, 1
        %v2079 = vrot.slane %v1905, 1
        %v2080 = vsel %vm447, %v2078, %v2079
        %v2081 = vrot.slane %v1996, 1
        %v2082 = vsel %vm447, %v2079, %v2081
        %v2083 = vrot.slane %v1981, 1
        %v2084 = vrot.slane %v1908, 1
        %v2085 = vsel %vm447, %v2083, %v2084
        %v2086 = vrot.slane %v1997, 1
        %v2087 = vsel %vm447, %v2084, %v2086
        %v2088 = vrot.slane %v1982, 1
        %v2089 = vrot.slane %v1911, 1
        %v2090 = vsel %vm447, %v2088, %v2089
        %v2091 = vrot.slane %v1998, 1
        %v2092 = vsel %vm447, %v2089, %v2091
        %v2093 = vrot.slane %v1983, 1
        %v2094 = vrot.slane %v1914, 1
        %v2095 = vsel %vm447, %v2093, %v2094
        %v2096 = vrot.slane %v1999, 1
        %v2097 = vsel %vm447, %v2094, %v2096
        %v2098 = vrot.slane %v1984, 1
        %v2099 = vrot.slane %v1917, 1
        %v2100 = vsel %vm447, %v2098, %v2099
        %v2101 = vrot.slane %v2000, 1
        %v2102 = vsel %vm447, %v2099, %v2101
        %v2103 = vrot.slane %v1985, 1
        %v2104 = vrot.slane %v1920, 1
        %v2105 = vsel %vm447, %v2103, %v2104
        %v2106 = vrot.slane %v2001, 1
        %v2107 = vsel %vm447, %v2104, %v2106
        %2108 = vrot.lane.b32.xlu0 %v449, 8
        %v2109 = vpop.permute.xlu0 %2108
        %2110 = vrot.lane.b32.xlu0 %v2035, 8
        %v2111 = vpop.permute.xlu0 %2110
        %2112 = vrot.lane.b32.xlu0 %v2037, 8
        %v2113 = vpop.permute.xlu0 %2112
        %2114 = vrot.lane.b32.xlu0 %v2040, 8
        %v2115 = vpop.permute.xlu0 %2114
        %2116 = vrot.lane.b32.xlu0 %v2042, 8
        %v2117 = vpop.permute.xlu0 %2116
        %2118 = vrot.lane.b32.xlu0 %v2045, 8
        %v2119 = vpop.permute.xlu0 %2118
        %2120 = vrot.lane.b32.xlu0 %v2047, 8
        %v2121 = vpop.permute.xlu0 %2120
        %2122 = vrot.lane.b32.xlu0 %v2050, 8
        %v2123 = vpop.permute.xlu0 %2122
        %2124 = vrot.lane.b32.xlu0 %v2052, 8
        %v2125 = vpop.permute.xlu0 %2124
        %2126 = vrot.lane.b32.xlu0 %v2055, 8
        %v2127 = vpop.permute.xlu0 %2126
        %2128 = vrot.lane.b32.xlu0 %v2057, 8
        %v2129 = vpop.permute.xlu0 %2128
        %2130 = vrot.lane.b32.xlu0 %v2060, 8
        %v2131 = vpop.permute.xlu0 %2130
        %2132 = vrot.lane.b32.xlu0 %v2062, 8
        %v2133 = vpop.permute.xlu0 %2132
        %2134 = vrot.lane.b32.xlu0 %v2065, 8
        %v2135 = vpop.permute.xlu0 %2134
        %2136 = vrot.lane.b32.xlu0 %v2067, 8
        %v2137 = vpop.permute.xlu0 %2136
        %2138 = vrot.lane.b32.xlu0 %v2070, 8
        %v2139 = vpop.permute.xlu0 %2138
        %2140 = vrot.lane.b32.xlu0 %v2072, 8
        %v2141 = vpop.permute.xlu0 %2140
        %2142 = vrot.lane.b32.xlu0 %v2075, 8
        %v2143 = vpop.permute.xlu0 %2142
        %2144 = vrot.lane.b32.xlu0 %v2077, 8
        %v2145 = vpop.permute.xlu0 %2144
        %2146 = vrot.lane.b32.xlu0 %v2080, 8
        %v2147 = vpop.permute.xlu0 %2146
        %2148 = vrot.lane.b32.xlu0 %v2082, 8
        %v2149 = vpop.permute.xlu0 %2148
        %2150 = vrot.lane.b32.xlu0 %v2085, 8
        %v2151 = vpop.permute.xlu0 %2150
        %2152 = vrot.lane.b32.xlu0 %v2087, 8
        %v2153 = vpop.permute.xlu0 %2152
        %2154 = vrot.lane.b32.xlu0 %v2090, 8
        %v2155 = vpop.permute.xlu0 %2154
        %2156 = vrot.lane.b32.xlu0 %v2092, 8
        %v2157 = vpop.permute.xlu0 %2156
        %2158 = vrot.lane.b32.xlu0 %v2095, 8
        %v2159 = vpop.permute.xlu0 %2158
        %2160 = vrot.lane.b32.xlu0 %v2097, 8
        %v2161 = vpop.permute.xlu0 %2160
        %2162 = vrot.lane.b32.xlu0 %v2100, 8
        %v2163 = vpop.permute.xlu0 %2162
        %2164 = vrot.lane.b32.xlu0 %v2102, 8
        %v2165 = vpop.permute.xlu0 %2164
        %2166 = vrot.lane.b32.xlu0 %v2105, 8
        %v2167 = vpop.permute.xlu0 %2166
        %2168 = vrot.lane.b32.xlu0 %v2107, 8
        %v2169 = vpop.permute.xlu0 %2168
        %v2201 = vrot.slane %v1971, 2
        %v2202 = vrot.slane %v1878, 2
        %v2203 = vsel %vm618, %v2201, %v2202
        %v2204 = vrot.slane %v1987, 2
        %v2205 = vsel %vm618, %v2202, %v2204
        %v2206 = vrot.slane %v1972, 2
        %v2207 = vrot.slane %v1881, 2
        %v2208 = vsel %vm618, %v2206, %v2207
        %v2209 = vrot.slane %v1988, 2
        %v2210 = vsel %vm618, %v2207, %v2209
        %v2211 = vrot.slane %v1973, 2
        %v2212 = vrot.slane %v1884, 2
        %v2213 = vsel %vm618, %v2211, %v2212
        %v2214 = vrot.slane %v1989, 2
        %v2215 = vsel %vm618, %v2212, %v2214
        %v2216 = vrot.slane %v1974, 2
        %v2217 = vrot.slane %v1887, 2
        %v2218 = vsel %vm618, %v2216, %v2217
        %v2219 = vrot.slane %v1990, 2
        %v2220 = vsel %vm618, %v2217, %v2219
        %v2221 = vrot.slane %v1975, 2
        %v2222 = vrot.slane %v1890, 2
        %v2223 = vsel %vm618, %v2221, %v2222
        %v2224 = vrot.slane %v1991, 2
        %v2225 = vsel %vm618, %v2222, %v2224
        %v2226 = vrot.slane %v1976, 2
        %v2227 = vrot.slane %v1893, 2
        %v2228 = vsel %vm618, %v2226, %v2227
        %v2229 = vrot.slane %v1992, 2
        %v2230 = vsel %vm618, %v2227, %v2229
        %v2231 = vrot.slane %v1977, 2
        %v2232 = vrot.slane %v1896, 2
        %v2233 = vsel %vm618, %v2231, %v2232
        %v2234 = vrot.slane %v1993, 2
        %v2235 = vsel %vm618, %v2232, %v2234
        %v2236 = vrot.slane %v1978, 2
        %v2237 = vrot.slane %v1899, 2
        %v2238 = vsel %vm618, %v2236, %v2237
        %v2239 = vrot.slane %v1994, 2
        %v2240 = vsel %vm618, %v2237, %v2239
        %v2241 = vrot.slane %v1979, 2
        %v2242 = vrot.slane %v1902, 2
        %v2243 = vsel %vm618, %v2241, %v2242
        %v2244 = vrot.slane %v1995, 2
        %v2245 = vsel %vm618, %v2242, %v2244
        %v2246 = vrot.slane %v1980, 2
        %v2247 = vrot.slane %v1905, 2
        %v2248 = vsel %vm618, %v2246, %v2247
        %v2249 = vrot.slane %v1996, 2
        %v2250 = vsel %vm618, %v2247, %v2249
        %v2251 = vrot.slane %v1981, 2
        %v2252 = vrot.slane %v1908, 2
        %v2253 = vsel %vm618, %v2251, %v2252
        %v2254 = vrot.slane %v1997, 2
        %v2255 = vsel %vm618, %v2252, %v2254
        %v2256 = vrot.slane %v1982, 2
        %v2257 = vrot.slane %v1911, 2
        %v2258 = vsel %vm618, %v2256, %v2257
        %v2259 = vrot.slane %v1998, 2
        %v2260 = vsel %vm618, %v2257, %v2259
        %v2261 = vrot.slane %v1983, 2
        %v2262 = vrot.slane %v1914, 2
        %v2263 = vsel %vm618, %v2261, %v2262
        %v2264 = vrot.slane %v1999, 2
        %v2265 = vsel %vm618, %v2262, %v2264
        %v2266 = vrot.slane %v1984, 2
        %v2267 = vrot.slane %v1917, 2
        %v2268 = vsel %vm618, %v2266, %v2267
        %v2269 = vrot.slane %v2000, 2
        %v2270 = vsel %vm618, %v2267, %v2269
        %v2271 = vrot.slane %v1985, 2
        %v2272 = vrot.slane %v1920, 2
        %v2273 = vsel %vm618, %v2271, %v2272
        %v2274 = vrot.slane %v2001, 2
        %v2275 = vsel %vm618, %v2272, %v2274
        %2276 = vrot.lane.b32.xlu0 %v620, 16
        %v2277 = vpop.permute.xlu0 %2276
        %2278 = vrot.lane.b32.xlu0 %v2203, 16
        %v2279 = vpop.permute.xlu0 %2278
        %2280 = vrot.lane.b32.xlu0 %v2205, 16
        %v2281 = vpop.permute.xlu0 %2280
        %2282 = vrot.lane.b32.xlu0 %v2208, 16
        %v2283 = vpop.permute.xlu0 %2282
        %2284 = vrot.lane.b32.xlu0 %v2210, 16
        %v2285 = vpop.permute.xlu0 %2284
        %2286 = vrot.lane.b32.xlu0 %v2213, 16
        %v2287 = vpop.permute.xlu0 %2286
        %2288 = vrot.lane.b32.xlu0 %v2215, 16
        %v2289 = vpop.permute.xlu0 %2288
        %2290 = vrot.lane.b32.xlu0 %v2218, 16
        %v2291 = vpop.permute.xlu0 %2290
        %2292 = vrot.lane.b32.xlu0 %v2220, 16
        %v2293 = vpop.permute.xlu0 %2292
        %2294 = vrot.lane.b32.xlu0 %v2223, 16
        %v2295 = vpop.permute.xlu0 %2294
        %2296 = vrot.lane.b32.xlu0 %v2225, 16
        %v2297 = vpop.permute.xlu0 %2296
        %2298 = vrot.lane.b32.xlu0 %v2228, 16
        %v2299 = vpop.permute.xlu0 %2298
        %2300 = vrot.lane.b32.xlu0 %v2230, 16
        %v2301 = vpop.permute.xlu0 %2300
        %2302 = vrot.lane.b32.xlu0 %v2233, 16
        %v2303 = vpop.permute.xlu0 %2302
        %2304 = vrot.lane.b32.xlu0 %v2235, 16
        %v2305 = vpop.permute.xlu0 %2304
        %2306 = vrot.lane.b32.xlu0 %v2238, 16
        %v2307 = vpop.permute.xlu0 %2306
        %2308 = vrot.lane.b32.xlu0 %v2240, 16
        %v2309 = vpop.permute.xlu0 %2308
        %2310 = vrot.lane.b32.xlu0 %v2243, 16
        %v2311 = vpop.permute.xlu0 %2310
        %2312 = vrot.lane.b32.xlu0 %v2245, 16
        %v2313 = vpop.permute.xlu0 %2312
        %2314 = vrot.lane.b32.xlu0 %v2248, 16
        %v2315 = vpop.permute.xlu0 %2314
        %2316 = vrot.lane.b32.xlu0 %v2250, 16
        %v2317 = vpop.permute.xlu0 %2316
        %2318 = vrot.lane.b32.xlu0 %v2253, 16
        %v2319 = vpop.permute.xlu0 %2318
        %2320 = vrot.lane.b32.xlu0 %v2255, 16
        %v2321 = vpop.permute.xlu0 %2320
        %2322 = vrot.lane.b32.xlu0 %v2258, 16
        %v2323 = vpop.permute.xlu0 %2322
        %2324 = vrot.lane.b32.xlu0 %v2260, 16
        %v2325 = vpop.permute.xlu0 %2324
        %2326 = vrot.lane.b32.xlu0 %v2263, 16
        %v2327 = vpop.permute.xlu0 %2326
        %2328 = vrot.lane.b32.xlu0 %v2265, 16
        %v2329 = vpop.permute.xlu0 %2328
        %2330 = vrot.lane.b32.xlu0 %v2268, 16
        %v2331 = vpop.permute.xlu0 %2330
        %2332 = vrot.lane.b32.xlu0 %v2270, 16
        %v2333 = vpop.permute.xlu0 %2332
        %2334 = vrot.lane.b32.xlu0 %v2273, 16
        %v2335 = vpop.permute.xlu0 %2334
        %2336 = vrot.lane.b32.xlu0 %v2275, 16
        %v2337 = vpop.permute.xlu0 %2336
        %2370 = vrot.lane.b32.xlu0 %v1971, 24
        %v2371 = vpop.permute.xlu0 %2370
        %2372 = vrot.lane.b32.xlu0 %v1878, 24
        %v2373 = vpop.permute.xlu0 %2372
        %2374 = vrot.lane.b32.xlu0 %v1972, 24
        %v2375 = vpop.permute.xlu0 %2374
        %2376 = vrot.lane.b32.xlu0 %v1881, 24
        %v2377 = vpop.permute.xlu0 %2376
        %2378 = vrot.lane.b32.xlu0 %v1973, 24
        %v2379 = vpop.permute.xlu0 %2378
        %2380 = vrot.lane.b32.xlu0 %v1884, 24
        %v2381 = vpop.permute.xlu0 %2380
        %2382 = vrot.lane.b32.xlu0 %v1974, 24
        %v2383 = vpop.permute.xlu0 %2382
        %2384 = vrot.lane.b32.xlu0 %v1887, 24
        %v2385 = vpop.permute.xlu0 %2384
        %2386 = vrot.lane.b32.xlu0 %v1975, 24
        %v2387 = vpop.permute.xlu0 %2386
        %2388 = vrot.lane.b32.xlu0 %v1890, 24
        %v2389 = vpop.permute.xlu0 %2388
        %2390 = vrot.lane.b32.xlu0 %v1976, 24
        %v2391 = vpop.permute.xlu0 %2390
        %2392 = vrot.lane.b32.xlu0 %v1893, 24
        %v2393 = vpop.permute.xlu0 %2392
        %2394 = vrot.lane.b32.xlu0 %v1977, 24
        %v2395 = vpop.permute.xlu0 %2394
        %2396 = vrot.lane.b32.xlu0 %v1896, 24
        %v2397 = vpop.permute.xlu0 %2396
        %2398 = vrot.lane.b32.xlu0 %v1978, 24
        %v2399 = vpop.permute.xlu0 %2398
        %2400 = vrot.lane.b32.xlu0 %v1899, 24
        %v2401 = vpop.permute.xlu0 %2400
        %2402 = vrot.lane.b32.xlu0 %v1979, 24
        %v2403 = vpop.permute.xlu0 %2402
        %2404 = vrot.lane.b32.xlu0 %v1902, 24
        %v2405 = vpop.permute.xlu0 %2404
        %2406 = vrot.lane.b32.xlu0 %v1980, 24
        %v2407 = vpop.permute.xlu0 %2406
        %2408 = vrot.lane.b32.xlu0 %v1905, 24
        %v2409 = vpop.permute.xlu0 %2408
        %2410 = vrot.lane.b32.xlu0 %v1981, 24
        %v2411 = vpop.permute.xlu0 %2410
        %2412 = vrot.lane.b32.xlu0 %v1908, 24
        %v2413 = vpop.permute.xlu0 %2412
        %2414 = vrot.lane.b32.xlu0 %v1982, 24
        %v2415 = vpop.permute.xlu0 %2414
        %2416 = vrot.lane.b32.xlu0 %v1911, 24
        %v2417 = vpop.permute.xlu0 %2416
        %2418 = vrot.lane.b32.xlu0 %v1983, 24
        %v2419 = vpop.permute.xlu0 %2418
        %2420 = vrot.lane.b32.xlu0 %v1914, 24
        %v2421 = vpop.permute.xlu0 %2420
        %2422 = vrot.lane.b32.xlu0 %v1984, 24
        %v2423 = vpop.permute.xlu0 %2422
        %2424 = vrot.lane.b32.xlu0 %v1917, 24
        %v2425 = vpop.permute.xlu0 %2424
        %2426 = vrot.lane.b32.xlu0 %v1985, 24
        %v2427 = vpop.permute.xlu0 %2426
        %2428 = vrot.lane.b32.xlu0 %v1920, 24
        %v2429 = vpop.permute.xlu0 %2428
        %2430 = vrot.lane.b32.xlu0 %v1986, 24
        %v2431 = vpop.permute.xlu0 %2430
        %2432 = vrot.lane.b32.xlu0 %v1923, 24
        %v2433 = vpop.permute.xlu0 %2432
        %v2467 = vrot.slane %v1986, 1
        %v2468 = vrot.slane %v1923, 1
        %v2469 = vsel %vm447, %v2467, %v2468
        %v2470 = vrot.slane %v2002, 1
        %v2471 = vsel %vm447, %v2468, %v2470
        %2472 = vrot.lane.b32.xlu0 %v2035, 32
        %v2473 = vpop.permute.xlu0 %2472
        %2474 = vrot.lane.b32.xlu0 %v2037, 32
        %v2475 = vpop.permute.xlu0 %2474
        %2476 = vrot.lane.b32.xlu0 %v2040, 32
        %v2477 = vpop.permute.xlu0 %2476
        %2478 = vrot.lane.b32.xlu0 %v2042, 32
        %v2479 = vpop.permute.xlu0 %2478
        %2480 = vrot.lane.b32.xlu0 %v2045, 32
        %v2481 = vpop.permute.xlu0 %2480
        %2482 = vrot.lane.b32.xlu0 %v2047, 32
        %v2483 = vpop.permute.xlu0 %2482
        %2484 = vrot.lane.b32.xlu0 %v2050, 32
        %v2485 = vpop.permute.xlu0 %2484
        %2486 = vrot.lane.b32.xlu0 %v2052, 32
        %v2487 = vpop.permute.xlu0 %2486
        %2488 = vrot.lane.b32.xlu0 %v2055, 32
        %v2489 = vpop.permute.xlu0 %2488
        %2490 = vrot.lane.b32.xlu0 %v2057, 32
        %v2491 = vpop.permute.xlu0 %2490
        %2492 = vrot.lane.b32.xlu0 %v2060, 32
        %v2493 = vpop.permute.xlu0 %2492
        %2494 = vrot.lane.b32.xlu0 %v2062, 32
        %v2495 = vpop.permute.xlu0 %2494
        %2496 = vrot.lane.b32.xlu0 %v2065, 32
        %v2497 = vpop.permute.xlu0 %2496
        %2498 = vrot.lane.b32.xlu0 %v2067, 32
        %v2499 = vpop.permute.xlu0 %2498
        %2500 = vrot.lane.b32.xlu0 %v2070, 32
        %v2501 = vpop.permute.xlu0 %2500
        %2502 = vrot.lane.b32.xlu0 %v2072, 32
        %v2503 = vpop.permute.xlu0 %2502
        %2504 = vrot.lane.b32.xlu0 %v2075, 32
        %v2505 = vpop.permute.xlu0 %2504
        %2506 = vrot.lane.b32.xlu0 %v2077, 32
        %v2507 = vpop.permute.xlu0 %2506
        %2508 = vrot.lane.b32.xlu0 %v2080, 32
        %v2509 = vpop.permute.xlu0 %2508
        %2510 = vrot.lane.b32.xlu0 %v2082, 32
        %v2511 = vpop.permute.xlu0 %2510
        %2512 = vrot.lane.b32.xlu0 %v2085, 32
        %v2513 = vpop.permute.xlu0 %2512
        %2514 = vrot.lane.b32.xlu0 %v2087, 32
        %v2515 = vpop.permute.xlu0 %2514
        %2516 = vrot.lane.b32.xlu0 %v2090, 32
        %v2517 = vpop.permute.xlu0 %2516
        %2518 = vrot.lane.b32.xlu0 %v2092, 32
        %v2519 = vpop.permute.xlu0 %2518
        %2520 = vrot.lane.b32.xlu0 %v2095, 32
        %v2521 = vpop.permute.xlu0 %2520
        %2522 = vrot.lane.b32.xlu0 %v2097, 32
        %v2523 = vpop.permute.xlu0 %2522
        %2524 = vrot.lane.b32.xlu0 %v2100, 32
        %v2525 = vpop.permute.xlu0 %2524
        %2526 = vrot.lane.b32.xlu0 %v2102, 32
        %v2527 = vpop.permute.xlu0 %2526
        %2528 = vrot.lane.b32.xlu0 %v2105, 32
        %v2529 = vpop.permute.xlu0 %2528
        %2530 = vrot.lane.b32.xlu0 %v2107, 32
        %v2531 = vpop.permute.xlu0 %2530
        %2532 = vrot.lane.b32.xlu0 %v2469, 32
        %v2533 = vpop.permute.xlu0 %2532
        %2534 = vrot.lane.b32.xlu0 %v2471, 32
        %v2535 = vpop.permute.xlu0 %2534
        %v2568 = vrot.slane %v1986, 2
        %v2569 = vrot.slane %v1923, 2
        %v2570 = vsel %vm618, %v2568, %v2569
        %v2571 = vrot.slane %v2002, 2
        %v2572 = vsel %vm618, %v2569, %v2571
        %2573 = vrot.lane.b32.xlu0 %v2203, 40
        %v2574 = vpop.permute.xlu0 %2573
        %2575 = vrot.lane.b32.xlu0 %v2205, 40
        %v2576 = vpop.permute.xlu0 %2575
        %2577 = vrot.lane.b32.xlu0 %v2208, 40
        %v2578 = vpop.permute.xlu0 %2577
        %2579 = vrot.lane.b32.xlu0 %v2210, 40
        %v2580 = vpop.permute.xlu0 %2579
        %2581 = vrot.lane.b32.xlu0 %v2213, 40
        %v2582 = vpop.permute.xlu0 %2581
        %2583 = vrot.lane.b32.xlu0 %v2215, 40
        %v2584 = vpop.permute.xlu0 %2583
        %2585 = vrot.lane.b32.xlu0 %v2218, 40
        %v2586 = vpop.permute.xlu0 %2585
        %2587 = vrot.lane.b32.xlu0 %v2220, 40
        %v2588 = vpop.permute.xlu0 %2587
        %2589 = vrot.lane.b32.xlu0 %v2223, 40
        %v2590 = vpop.permute.xlu0 %2589
        %2591 = vrot.lane.b32.xlu0 %v2225, 40
        %v2592 = vpop.permute.xlu0 %2591
        %2593 = vrot.lane.b32.xlu0 %v2228, 40
        %v2594 = vpop.permute.xlu0 %2593
        %2595 = vrot.lane.b32.xlu0 %v2230, 40
        %v2596 = vpop.permute.xlu0 %2595
        %2597 = vrot.lane.b32.xlu0 %v2233, 40
        %v2598 = vpop.permute.xlu0 %2597
        %2599 = vrot.lane.b32.xlu0 %v2235, 40
        %v2600 = vpop.permute.xlu0 %2599
        %2601 = vrot.lane.b32.xlu0 %v2238, 40
        %v2602 = vpop.permute.xlu0 %2601
        %2603 = vrot.lane.b32.xlu0 %v2240, 40
        %v2604 = vpop.permute.xlu0 %2603
        %2605 = vrot.lane.b32.xlu0 %v2243, 40
        %v2606 = vpop.permute.xlu0 %2605
        %2607 = vrot.lane.b32.xlu0 %v2245, 40
        %v2608 = vpop.permute.xlu0 %2607
        %2609 = vrot.lane.b32.xlu0 %v2248, 40
        %v2610 = vpop.permute.xlu0 %2609
        %2611 = vrot.lane.b32.xlu0 %v2250, 40
        %v2612 = vpop.permute.xlu0 %2611
        %2613 = vrot.lane.b32.xlu0 %v2253, 40
        %v2614 = vpop.permute.xlu0 %2613
        %2615 = vrot.lane.b32.xlu0 %v2255, 40
        %v2616 = vpop.permute.xlu0 %2615
        %2617 = vrot.lane.b32.xlu0 %v2258, 40
        %v2618 = vpop.permute.xlu0 %2617
        %2619 = vrot.lane.b32.xlu0 %v2260, 40
        %v2620 = vpop.permute.xlu0 %2619
        %2621 = vrot.lane.b32.xlu0 %v2263, 40
        %v2622 = vpop.permute.xlu0 %2621
        %2623 = vrot.lane.b32.xlu0 %v2265, 40
        %v2624 = vpop.permute.xlu0 %2623
        %2625 = vrot.lane.b32.xlu0 %v2268, 40
        %v2626 = vpop.permute.xlu0 %2625
        %2627 = vrot.lane.b32.xlu0 %v2270, 40
        %v2628 = vpop.permute.xlu0 %2627
        %2629 = vrot.lane.b32.xlu0 %v2273, 40
        %v2630 = vpop.permute.xlu0 %2629
        %2631 = vrot.lane.b32.xlu0 %v2275, 40
        %v2632 = vpop.permute.xlu0 %2631
        %2633 = vrot.lane.b32.xlu0 %v2570, 40
        %v2634 = vpop.permute.xlu0 %2633
        %2635 = vrot.lane.b32.xlu0 %v2572, 40
        %v2636 = vpop.permute.xlu0 %2635
        %2669 = vrot.lane.b32.xlu0 %v1972, 48
        %v2670 = vpop.permute.xlu0 %2669
        %2671 = vrot.lane.b32.xlu0 %v1881, 48
        %v2672 = vpop.permute.xlu0 %2671
        %2673 = vrot.lane.b32.xlu0 %v1973, 48
        %v2674 = vpop.permute.xlu0 %2673
        %2675 = vrot.lane.b32.xlu0 %v1884, 48
        %v2676 = vpop.permute.xlu0 %2675
        %2677 = vrot.lane.b32.xlu0 %v1974, 48
        %v2678 = vpop.permute.xlu0 %2677
        %2679 = vrot.lane.b32.xlu0 %v1887, 48
        %v2680 = vpop.permute.xlu0 %2679
        %2681 = vrot.lane.b32.xlu0 %v1975, 48
        %v2682 = vpop.permute.xlu0 %2681
        %2683 = vrot.lane.b32.xlu0 %v1890, 48
        %v2684 = vpop.permute.xlu0 %2683
        %2685 = vrot.lane.b32.xlu0 %v1976, 48
        %v2686 = vpop.permute.xlu0 %2685
        %2687 = vrot.lane.b32.xlu0 %v1893, 48
        %v2688 = vpop.permute.xlu0 %2687
        %2689 = vrot.lane.b32.xlu0 %v1977, 48
        %v2690 = vpop.permute.xlu0 %2689
        %2691 = vrot.lane.b32.xlu0 %v1896, 48
        %v2692 = vpop.permute.xlu0 %2691
        %2693 = vrot.lane.b32.xlu0 %v1978, 48
        %v2694 = vpop.permute.xlu0 %2693
        %2695 = vrot.lane.b32.xlu0 %v1899, 48
        %v2696 = vpop.permute.xlu0 %2695
        %2697 = vrot.lane.b32.xlu0 %v1979, 48
        %v2698 = vpop.permute.xlu0 %2697
        %2699 = vrot.lane.b32.xlu0 %v1902, 48
        %v2700 = vpop.permute.xlu0 %2699
        %2701 = vrot.lane.b32.xlu0 %v1980, 48
        %v2702 = vpop.permute.xlu0 %2701
        %2703 = vrot.lane.b32.xlu0 %v1905, 48
        %v2704 = vpop.permute.xlu0 %2703
        %2705 = vrot.lane.b32.xlu0 %v1981, 48
        %v2706 = vpop.permute.xlu0 %2705
        %2707 = vrot.lane.b32.xlu0 %v1908, 48
        %v2708 = vpop.permute.xlu0 %2707
        %2709 = vrot.lane.b32.xlu0 %v1982, 48
        %v2710 = vpop.permute.xlu0 %2709
        %2711 = vrot.lane.b32.xlu0 %v1911, 48
        %v2712 = vpop.permute.xlu0 %2711
        %2713 = vrot.lane.b32.xlu0 %v1983, 48
        %v2714 = vpop.permute.xlu0 %2713
        %2715 = vrot.lane.b32.xlu0 %v1914, 48
        %v2716 = vpop.permute.xlu0 %2715
        %2717 = vrot.lane.b32.xlu0 %v1984, 48
        %v2718 = vpop.permute.xlu0 %2717
        %2719 = vrot.lane.b32.xlu0 %v1917, 48
        %v2720 = vpop.permute.xlu0 %2719
        %2721 = vrot.lane.b32.xlu0 %v1985, 48
        %v2722 = vpop.permute.xlu0 %2721
        %2723 = vrot.lane.b32.xlu0 %v1920, 48
        %v2724 = vpop.permute.xlu0 %2723
        %2725 = vrot.lane.b32.xlu0 %v1986, 48
        %v2726 = vpop.permute.xlu0 %2725
        %2727 = vrot.lane.b32.xlu0 %v1923, 48
        %v2728 = vpop.permute.xlu0 %2727
        %2729 = vrot.lane.b32.xlu0 0.0, 48
        %v2730 = vpop.permute.xlu0 %2729
        %2762 = vrot.lane.b32.xlu0 %v2040, 56
        %v2763 = vpop.permute.xlu0 %2762
        %2764 = vrot.lane.b32.xlu0 %v2042, 56
        %v2765 = vpop.permute.xlu0 %2764
        %2766 = vrot.lane.b32.xlu0 %v2045, 56
        %v2767 = vpop.permute.xlu0 %2766
        %2768 = vrot.lane.b32.xlu0 %v2047, 56
        %v2769 = vpop.permute.xlu0 %2768
        %2770 = vrot.lane.b32.xlu0 %v2050, 56
        %v2771 = vpop.permute.xlu0 %2770
        %2772 = vrot.lane.b32.xlu0 %v2052, 56
        %v2773 = vpop.permute.xlu0 %2772
        %2774 = vrot.lane.b32.xlu0 %v2055, 56
        %v2775 = vpop.permute.xlu0 %2774
        %2776 = vrot.lane.b32.xlu0 %v2057, 56
        %v2777 = vpop.permute.xlu0 %2776
        %2778 = vrot.lane.b32.xlu0 %v2060, 56
        %v2779 = vpop.permute.xlu0 %2778
        %2780 = vrot.lane.b32.xlu0 %v2062, 56
        %v2781 = vpop.permute.xlu0 %2780
        %2782 = vrot.lane.b32.xlu0 %v2065, 56
        %v2783 = vpop.permute.xlu0 %2782
        %2784 = vrot.lane.b32.xlu0 %v2067, 56
        %v2785 = vpop.permute.xlu0 %2784
        %2786 = vrot.lane.b32.xlu0 %v2070, 56
        %v2787 = vpop.permute.xlu0 %2786
        %2788 = vrot.lane.b32.xlu0 %v2072, 56
        %v2789 = vpop.permute.xlu0 %2788
        %2790 = vrot.lane.b32.xlu0 %v2075, 56
        %v2791 = vpop.permute.xlu0 %2790
        %2792 = vrot.lane.b32.xlu0 %v2077, 56
        %v2793 = vpop.permute.xlu0 %2792
        %2794 = vrot.lane.b32.xlu0 %v2080, 56
        %v2795 = vpop.permute.xlu0 %2794
        %2796 = vrot.lane.b32.xlu0 %v2082, 56
        %v2797 = vpop.permute.xlu0 %2796
        %2798 = vrot.lane.b32.xlu0 %v2085, 56
        %v2799 = vpop.permute.xlu0 %2798
        %2800 = vrot.lane.b32.xlu0 %v2087, 56
        %v2801 = vpop.permute.xlu0 %2800
        %2802 = vrot.lane.b32.xlu0 %v2090, 56
        %v2803 = vpop.permute.xlu0 %2802
        %2804 = vrot.lane.b32.xlu0 %v2092, 56
        %v2805 = vpop.permute.xlu0 %2804
        %2806 = vrot.lane.b32.xlu0 %v2095, 56
        %v2807 = vpop.permute.xlu0 %2806
        %2808 = vrot.lane.b32.xlu0 %v2097, 56
        %v2809 = vpop.permute.xlu0 %2808
        %2810 = vrot.lane.b32.xlu0 %v2100, 56
        %v2811 = vpop.permute.xlu0 %2810
        %2812 = vrot.lane.b32.xlu0 %v2102, 56
        %v2813 = vpop.permute.xlu0 %2812
        %2814 = vrot.lane.b32.xlu0 %v2105, 56
        %v2815 = vpop.permute.xlu0 %2814
        %2816 = vrot.lane.b32.xlu0 %v2107, 56
        %v2817 = vpop.permute.xlu0 %2816
        %2818 = vrot.lane.b32.xlu0 %v2469, 56
        %v2819 = vpop.permute.xlu0 %2818
        %2820 = vrot.lane.b32.xlu0 %v2471, 56
        %v2821 = vpop.permute.xlu0 %2820
        %2822 = vrot.lane.b32.xlu0 %v449, 56
        %v2823 = vpop.permute.xlu0 %2822
        %2855 = vrot.lane.b32.xlu0 %v2208, 64
        %v2856 = vpop.permute.xlu0 %2855
        %2857 = vrot.lane.b32.xlu0 %v2210, 64
        %v2858 = vpop.permute.xlu0 %2857
        %2859 = vrot.lane.b32.xlu0 %v2213, 64
        %v2860 = vpop.permute.xlu0 %2859
        %2861 = vrot.lane.b32.xlu0 %v2215, 64
        %v2862 = vpop.permute.xlu0 %2861
        %2863 = vrot.lane.b32.xlu0 %v2218, 64
        %v2864 = vpop.permute.xlu0 %2863
        %2865 = vrot.lane.b32.xlu0 %v2220, 64
        %v2866 = vpop.permute.xlu0 %2865
        %2867 = vrot.lane.b32.xlu0 %v2223, 64
        %v2868 = vpop.permute.xlu0 %2867
        %2869 = vrot.lane.b32.xlu0 %v2225, 64
        %v2870 = vpop.permute.xlu0 %2869
        %2871 = vrot.lane.b32.xlu0 %v2228, 64
        %v2872 = vpop.permute.xlu0 %2871
        %2873 = vrot.lane.b32.xlu0 %v2230, 64
        %v2874 = vpop.permute.xlu0 %2873
        %2875 = vrot.lane.b32.xlu0 %v2233, 64
        %v2876 = vpop.permute.xlu0 %2875
        %2877 = vrot.lane.b32.xlu0 %v2235, 64
        %v2878 = vpop.permute.xlu0 %2877
        %2879 = vrot.lane.b32.xlu0 %v2238, 64
        %v2880 = vpop.permute.xlu0 %2879
        %2881 = vrot.lane.b32.xlu0 %v2240, 64
        %v2882 = vpop.permute.xlu0 %2881
        %2883 = vrot.lane.b32.xlu0 %v2243, 64
        %v2884 = vpop.permute.xlu0 %2883
        %2885 = vrot.lane.b32.xlu0 %v2245, 64
        %v2886 = vpop.permute.xlu0 %2885
        %2887 = vrot.lane.b32.xlu0 %v2248, 64
        %v2888 = vpop.permute.xlu0 %2887
        %2889 = vrot.lane.b32.xlu0 %v2250, 64
        %v2890 = vpop.permute.xlu0 %2889
        %2891 = vrot.lane.b32.xlu0 %v2253, 64
        %v2892 = vpop.permute.xlu0 %2891
        %2893 = vrot.lane.b32.xlu0 %v2255, 64
        %v2894 = vpop.permute.xlu0 %2893
        %2895 = vrot.lane.b32.xlu0 %v2258, 64
        %v2896 = vpop.permute.xlu0 %2895
        %2897 = vrot.lane.b32.xlu0 %v2260, 64
        %v2898 = vpop.permute.xlu0 %2897
        %2899 = vrot.lane.b32.xlu0 %v2263, 64
        %v2900 = vpop.permute.xlu0 %2899
        %2901 = vrot.lane.b32.xlu0 %v2265, 64
        %v2902 = vpop.permute.xlu0 %2901
        %2903 = vrot.lane.b32.xlu0 %v2268, 64
        %v2904 = vpop.permute.xlu0 %2903
        %2905 = vrot.lane.b32.xlu0 %v2270, 64
        %v2906 = vpop.permute.xlu0 %2905
        %2907 = vrot.lane.b32.xlu0 %v2273, 64
        %v2908 = vpop.permute.xlu0 %2907
        %2909 = vrot.lane.b32.xlu0 %v2275, 64
        %v2910 = vpop.permute.xlu0 %2909
        %2911 = vrot.lane.b32.xlu0 %v2570, 64
        %v2912 = vpop.permute.xlu0 %2911
        %2913 = vrot.lane.b32.xlu0 %v2572, 64
        %v2914 = vpop.permute.xlu0 %2913
        %2915 = vrot.lane.b32.xlu0 %v620, 64
        %v2916 = vpop.permute.xlu0 %2915
        %v2948 = vsel %vm1400, 0.0, %v2109
        %v2949 = vsel %vm1400, %v1971, %v2111
        %v2950 = vsel %vm1400, %v1878, %v2113
        %v2951 = vsel %vm1400, %v1972, %v2115
        %v2952 = vsel %vm1400, %v1881, %v2117
        %v2953 = vsel %vm1400, %v1973, %v2119
        %v2954 = vsel %vm1400, %v1884, %v2121
        %v2955 = vsel %vm1400, %v1974, %v2123
        %v2956 = vsel %vm1400, %v1887, %v2125
        %v2957 = vsel %vm1400, %v1975, %v2127
        %v2958 = vsel %vm1400, %v1890, %v2129
        %v2959 = vsel %vm1400, %v1976, %v2131
        %v2960 = vsel %vm1400, %v1893, %v2133
        %v2961 = vsel %vm1400, %v1977, %v2135
        %v2962 = vsel %vm1400, %v1896, %v2137
        %v2963 = vsel %vm1400, %v1978, %v2139
        %v2964 = vsel %vm1400, %v1899, %v2141
        %v2965 = vsel %vm1400, %v1979, %v2143
        %v2966 = vsel %vm1400, %v1902, %v2145
        %v2967 = vsel %vm1400, %v1980, %v2147
        %v2968 = vsel %vm1400, %v1905, %v2149
        %v2969 = vsel %vm1400, %v1981, %v2151
        %v2970 = vsel %vm1400, %v1908, %v2153
        %v2971 = vsel %vm1400, %v1982, %v2155
        %v2972 = vsel %vm1400, %v1911, %v2157
        %v2973 = vsel %vm1400, %v1983, %v2159
        %v2974 = vsel %vm1400, %v1914, %v2161
        %v2975 = vsel %vm1400, %v1984, %v2163
        %v2976 = vsel %vm1400, %v1917, %v2165
        %v2977 = vsel %vm1400, %v1985, %v2167
        %v2978 = vsel %vm1400, %v1920, %v2169
        %v2979 = vsel %vm1465, %v2948, %v2277
        %v2980 = vsel %vm1465, %v2949, %v2279
        %v2981 = vsel %vm1465, %v2950, %v2281
        %v2982 = vsel %vm1465, %v2951, %v2283
        %v2983 = vsel %vm1465, %v2952, %v2285
        %v2984 = vsel %vm1465, %v2953, %v2287
        %v2985 = vsel %vm1465, %v2954, %v2289
        %v2986 = vsel %vm1465, %v2955, %v2291
        %v2987 = vsel %vm1465, %v2956, %v2293
        %v2988 = vsel %vm1465, %v2957, %v2295
        %v2989 = vsel %vm1465, %v2958, %v2297
        %v2990 = vsel %vm1465, %v2959, %v2299
        %v2991 = vsel %vm1465, %v2960, %v2301
        %v2992 = vsel %vm1465, %v2961, %v2303
        %v2993 = vsel %vm1465, %v2962, %v2305
        %v2994 = vsel %vm1465, %v2963, %v2307
        %v2995 = vsel %vm1465, %v2964, %v2309
        %v2996 = vsel %vm1465, %v2965, %v2311
        %v2997 = vsel %vm1465, %v2966, %v2313
        %v2998 = vsel %vm1465, %v2967, %v2315
        %v2999 = vsel %vm1465, %v2968, %v2317
        %v3000 = vsel %vm1465, %v2969, %v2319
        %v3001 = vsel %vm1465, %v2970, %v2321
        %v3002 = vsel %vm1465, %v2971, %v2323
        %v3003 = vsel %vm1465, %v2972, %v2325
        %v3004 = vsel %vm1465, %v2973, %v2327
        %v3005 = vsel %vm1465, %v2974, %v2329
        %v3006 = vsel %vm1465, %v2975, %v2331
        %v3007 = vsel %vm1465, %v2976, %v2333
        %v3008 = vsel %vm1465, %v2977, %v2335
        %v3009 = vsel %vm1465, %v2978, %v2337
        %v3010 = vsel %vm1531, %v2979, %v2371
        %v3011 = vsel %vm1531, %v2979, %v2373
        %v3012 = vsel %vm1531, %v2980, %v2375
        %v3013 = vsel %vm1531, %v2981, %v2377
        %v3014 = vsel %vm1531, %v2982, %v2379
        %v3015 = vsel %vm1531, %v2983, %v2381
        %v3016 = vsel %vm1531, %v2984, %v2383
        %v3017 = vsel %vm1531, %v2985, %v2385
        %v3018 = vsel %vm1531, %v2986, %v2387
        %v3019 = vsel %vm1531, %v2987, %v2389
        %v3020 = vsel %vm1531, %v2988, %v2391
        %v3021 = vsel %vm1531, %v2989, %v2393
        %v3022 = vsel %vm1531, %v2990, %v2395
        %v3023 = vsel %vm1531, %v2991, %v2397
        %v3024 = vsel %vm1531, %v2992, %v2399
        %v3025 = vsel %vm1531, %v2993, %v2401
        %v3026 = vsel %vm1531, %v2994, %v2403
        %v3027 = vsel %vm1531, %v2995, %v2405
        %v3028 = vsel %vm1531, %v2996, %v2407
        %v3029 = vsel %vm1531, %v2997, %v2409
        %v3030 = vsel %vm1531, %v2998, %v2411
        %v3031 = vsel %vm1531, %v2999, %v2413
        %v3032 = vsel %vm1531, %v3000, %v2415
        %v3033 = vsel %vm1531, %v3001, %v2417
        %v3034 = vsel %vm1531, %v3002, %v2419
        %v3035 = vsel %vm1531, %v3003, %v2421
        %v3036 = vsel %vm1531, %v3004, %v2423
        %v3037 = vsel %vm1531, %v3005, %v2425
        %v3038 = vsel %vm1531, %v3006, %v2427
        %v3039 = vsel %vm1531, %v3007, %v2429
        %v3040 = vsel %vm1531, %v3008, %v2431
        %v3041 = vsel %vm1531, %v3009, %v2433
        %v3042 = vsel %vm1597, %v3010, %v2473
        %v3043 = vsel %vm1597, %v3011, %v2475
        %v3044 = vsel %vm1597, %v3012, %v2477
        %v3045 = vsel %vm1597, %v3013, %v2479
        %v3046 = vsel %vm1597, %v3014, %v2481
        %v3047 = vsel %vm1597, %v3015, %v2483
        %v3048 = vsel %vm1597, %v3016, %v2485
        %v3049 = vsel %vm1597, %v3017, %v2487
        %v3050 = vsel %vm1597, %v3018, %v2489
        %v3051 = vsel %vm1597, %v3019, %v2491
        %v3052 = vsel %vm1597, %v3020, %v2493
        %v3053 = vsel %vm1597, %v3021, %v2495
        %v3054 = vsel %vm1597, %v3022, %v2497
        %v3055 = vsel %vm1597, %v3023, %v2499
        %v3056 = vsel %vm1597, %v3024, %v2501
        %v3057 = vsel %vm1597, %v3025, %v2503
        %v3058 = vsel %vm1597, %v3026, %v2505
        %v3059 = vsel %vm1597, %v3027, %v2507
        %v3060 = vsel %vm1597, %v3028, %v2509
        %v3061 = vsel %vm1597, %v3029, %v2511
        %v3062 = vsel %vm1597, %v3030, %v2513
        %v3063 = vsel %vm1597, %v3031, %v2515
        %v3064 = vsel %vm1597, %v3032, %v2517
        %v3065 = vsel %vm1597, %v3033, %v2519
        %v3066 = vsel %vm1597, %v3034, %v2521
        %v3067 = vsel %vm1597, %v3035, %v2523
        %v3068 = vsel %vm1597, %v3036, %v2525
        %v3069 = vsel %vm1597, %v3037, %v2527
        %v3070 = vsel %vm1597, %v3038, %v2529
        %v3071 = vsel %vm1597, %v3039, %v2531
        %v3072 = vsel %vm1597, %v3040, %v2533
        %v3073 = vsel %vm1597, %v3041, %v2535
        %vm3074 = vcmask 326656
        %v3075 = vsel %vm3074, %v3042, %v2574
        %v3076 = vsel %vm3074, %v3043, %v2576
        %v3077 = vsel %vm3074, %v3044, %v2578
        %v3078 = vsel %vm3074, %v3045, %v2580
        %v3079 = vsel %vm3074, %v3046, %v2582
        %v3080 = vsel %vm3074, %v3047, %v2584
        %v3081 = vsel %vm3074, %v3048, %v2586
        %v3082 = vsel %vm3074, %v3049, %v2588
        %v3083 = vsel %vm3074, %v3050, %v2590
        %v3084 = vsel %vm3074, %v3051, %v2592
        %v3085 = vsel %vm3074, %v3052, %v2594
        %v3086 = vsel %vm3074, %v3053, %v2596
        %v3087 = vsel %vm3074, %v3054, %v2598
        %v3088 = vsel %vm3074, %v3055, %v2600
        %v3089 = vsel %vm3074, %v3056, %v2602
        %v3090 = vsel %vm3074, %v3057, %v2604
        %v3091 = vsel %vm3074, %v3058, %v2606
        %v3092 = vsel %vm3074, %v3059, %v2608
        %v3093 = vsel %vm3074, %v3060, %v2610
        %v3094 = vsel %vm3074, %v3061, %v2612
        %v3095 = vsel %vm3074, %v3062, %v2614
        %v3096 = vsel %vm3074, %v3063, %v2616
        %v3097 = vsel %vm3074, %v3064, %v2618
        %v3098 = vsel %vm3074, %v3065, %v2620
        %v3099 = vsel %vm3074, %v3066, %v2622
        %v3100 = vsel %vm3074, %v3067, %v2624
        %v3101 = vsel %vm3074, %v3068, %v2626
        %v3102 = vsel %vm3074, %v3069, %v2628
        %v3103 = vsel %vm3074, %v3070, %v2630
        %v3104 = vsel %vm3074, %v3071, %v2632
        %v3105 = vsel %vm3074, %v3072, %v2634
        %v3106 = vsel %vm3074, %v3073, %v2636
        %vm3107 = vcmask 392192
        %v3108 = vsel %vm3107, %v3075, %v2670
        %v3109 = vsel %vm3107, %v3076, %v2672
        %v3110 = vsel %vm3107, %v3077, %v2674
        %v3111 = vsel %vm3107, %v3078, %v2676
        %v3112 = vsel %vm3107, %v3079, %v2678
        %v3113 = vsel %vm3107, %v3080, %v2680
        %v3114 = vsel %vm3107, %v3081, %v2682
        %v3115 = vsel %vm3107, %v3082, %v2684
        %v3116 = vsel %vm3107, %v3083, %v2686
        %v3117 = vsel %vm3107, %v3084, %v2688
        %v3118 = vsel %vm3107, %v3085, %v2690
        %v3119 = vsel %vm3107, %v3086, %v2692
        %v3120 = vsel %vm3107, %v3087, %v2694
        %v3121 = vsel %vm3107, %v3088, %v2696
        %v3122 = vsel %vm3107, %v3089, %v2698
        %v3123 = vsel %vm3107, %v3090, %v2700
        %v3124 = vsel %vm3107, %v3091, %v2702
        %v3125 = vsel %vm3107, %v3092, %v2704
        %v3126 = vsel %vm3107, %v3093, %v2706
        %v3127 = vsel %vm3107, %v3094, %v2708
        %v3128 = vsel %vm3107, %v3095, %v2710
        %v3129 = vsel %vm3107, %v3096, %v2712
        %v3130 = vsel %vm3107, %v3097, %v2714
        %v3131 = vsel %vm3107, %v3098, %v2716
        %v3132 = vsel %vm3107, %v3099, %v2718
        %v3133 = vsel %vm3107, %v3100, %v2720
        %v3134 = vsel %vm3107, %v3101, %v2722
        %v3135 = vsel %vm3107, %v3102, %v2724
        %v3136 = vsel %vm3107, %v3103, %v2726
        %v3137 = vsel %vm3107, %v3104, %v2728
        %v3138 = vsel %vm3107, %v3105, %v2730
        %v3139 = vsel %vm3107, %v3106, %v2730
        %vm3140 = vcmask 457728
        %v3141 = vsel %vm3140, %v3108, %v2763
        %v3142 = vsel %vm3140, %v3109, %v2765
        %v3143 = vsel %vm3140, %v3110, %v2767
        %v3144 = vsel %vm3140, %v3111, %v2769
        %v3145 = vsel %vm3140, %v3112, %v2771
        %v3146 = vsel %vm3140, %v3113, %v2773
        %v3147 = vsel %vm3140, %v3114, %v2775
        %v3148 = vsel %vm3140, %v3115, %v2777
        %v3149 = vsel %vm3140, %v3116, %v2779
        %v3150 = vsel %vm3140, %v3117, %v2781
        %v3151 = vsel %vm3140, %v3118, %v2783
        %v3152 = vsel %vm3140, %v3119, %v2785
        %v3153 = vsel %vm3140, %v3120, %v2787
        %v3154 = vsel %vm3140, %v3121, %v2789
        %v3155 = vsel %vm3140, %v3122, %v2791
        %v3156 = vsel %vm3140, %v3123, %v2793
        %v3157 = vsel %vm3140, %v3124, %v2795
        %v3158 = vsel %vm3140, %v3125, %v2797
        %v3159 = vsel %vm3140, %v3126, %v2799
        %v3160 = vsel %vm3140, %v3127, %v2801
        %v3161 = vsel %vm3140, %v3128, %v2803
        %v3162 = vsel %vm3140, %v3129, %v2805
        %v3163 = vsel %vm3140, %v3130, %v2807
        %v3164 = vsel %vm3140, %v3131, %v2809
        %v3165 = vsel %vm3140, %v3132, %v2811
        %v3166 = vsel %vm3140, %v3133, %v2813
        %v3167 = vsel %vm3140, %v3134, %v2815
        %v3168 = vsel %vm3140, %v3135, %v2817
        %v3169 = vsel %vm3140, %v3136, %v2819
        %v3170 = vsel %vm3140, %v3137, %v2821
        %v3171 = vsel %vm3140, %v3138, %v2823
        %v3172 = vsel %vm3140, %v3139, %v2823
        %vm3173 = vcmask 523264
        %v3174 = vsel %vm3173, %v3141, %v2856
        %v3175 = vsel %vm3173, %v3142, %v2858
        %v3176 = vsel %vm3173, %v3143, %v2860
        %v3177 = vsel %vm3173, %v3144, %v2862
        %v3178 = vsel %vm3173, %v3145, %v2864
        %v3179 = vsel %vm3173, %v3146, %v2866
        %v3180 = vsel %vm3173, %v3147, %v2868
        %v3181 = vsel %vm3173, %v3148, %v2870
        %v3182 = vsel %vm3173, %v3149, %v2872
        %v3183 = vsel %vm3173, %v3150, %v2874
        %v3184 = vsel %vm3173, %v3151, %v2876
        %v3185 = vsel %vm3173, %v3152, %v2878
        %v3186 = vsel %vm3173, %v3153, %v2880
        %v3187 = vsel %vm3173, %v3154, %v2882
        %v3188 = vsel %vm3173, %v3155, %v2884
        %v3189 = vsel %vm3173, %v3156, %v2886
        %v3190 = vsel %vm3173, %v3157, %v2888
        %v3191 = vsel %vm3173, %v3158, %v2890
        %v3192 = vsel %vm3173, %v3159, %v2892
        %v3193 = vsel %vm3173, %v3160, %v2894
        %v3194 = vsel %vm3173, %v3161, %v2896
        %v3195 = vsel %vm3173, %v3162, %v2898
        %v3196 = vsel %vm3173, %v3163, %v2900
        %v3197 = vsel %vm3173, %v3164, %v2902
        %v3198 = vsel %vm3173, %v3165, %v2904
        %v3199 = vsel %vm3173, %v3166, %v2906
        %v3200 = vsel %vm3173, %v3167, %v2908
        %v3201 = vsel %vm3173, %v3168, %v2910
        %v3202 = vsel %vm3173, %v3169, %v2912
        %v3203 = vsel %vm3173, %v3170, %v2914
        %v3204 = vsel %vm3173, %v3171, %v2916
        %v3205 = vsel %vm3173, %v3172, %v2916
        %v3206 = vpack.c.bf16 %v3175, %v3174
        %v3207 = vpack.c.bf16 %v3177, %v3176
        %v3208 = vpack.c.bf16 %v3179, %v3178
        %v3209 = vpack.c.bf16 %v3181, %v3180
        %v3210 = vpack.c.bf16 %v3183, %v3182
        %v3211 = vpack.c.bf16 %v3185, %v3184
        %v3212 = vpack.c.bf16 %v3187, %v3186
        %v3213 = vpack.c.bf16 %v3189, %v3188
        %v3214 = vpack.c.bf16 %v3191, %v3190
        %v3215 = vpack.c.bf16 %v3193, %v3192
        %v3216 = vpack.c.bf16 %v3195, %v3194
        %v3217 = vpack.c.bf16 %v3197, %v3196
        %v3218 = vpack.c.bf16 %v3199, %v3198
        %v3219 = vpack.c.bf16 %v3201, %v3200
        %v3220 = vpack.c.bf16 %v3203, %v3202
        %v3221 = vpack.c.bf16 %v3205, %v3204
        %v3222 = vld [vmem:[%s3] sm:$0xf]
        %v3223 = vld [vmem:[%s3 + $0x4] sm:$0xf]
        %v3224 = vld [vmem:[%s3 + $0x8] sm:$0xf]
        %v3225 = vld [vmem:[%s3 + $0xc] sm:$0xf]
        %v3226 = vld [vmem:[%s3 + $0x10] sm:$0xf]
        %v3227 = vld [vmem:[%s3 + $0x14] sm:$0xf]
        %v3228 = vld [vmem:[%s3 + $0x18] sm:$0xf]
        %v3229 = vld [vmem:[%s3 + $0x1c] sm:$0xf]
        %v3230 = vld [vmem:[%s3 + $0x20] sm:$0xf]
        %v3231 = vld [vmem:[%s4] sm:$0x1]
        %v3233 = vperm.slane %v3231, 0
        %v3244 = vunpack.c.l.b16 %v3222
        %v3245 = vunpack.c.l.b16 %v3223
        %v3246 = vunpack.c.l.b16 %v3224
        %v3247 = vunpack.c.l.b16 %v3225
        %v3248 = vunpack.c.l.b16 %v3226
        %v3249 = vunpack.c.l.b16 %v3227
        %v3250 = vunpack.c.l.b16 %v3228
        %v3251 = vunpack.c.l.b16 %v3229
        %v3252 = vunpack.c.l.b16 %v3230
        %v3253 = vpack.c.b16 %v3245, %v3244
        %v3254 = vpack.c.b16 %v3247, %v3246
        %v3255 = vpack.c.b16 %v3249, %v3248
        %v3256 = vpack.c.b16 %v3251, %v3250
        %v3257 = vpack.c.b16 %v3252, %v3252
        %vm3262 = vcmask 588800
        %v3264 = vsel %vm3262, %v3206, 0
        %v3267 = vsel %vm3262, %v3207, 0
        %v3270 = vsel %vm3262, %v3208, 0
        %v3273 = vsel %vm3262, %v3209, 0
        %v3276 = vsel %vm3262, %v3210, 0
        %v3279 = vsel %vm3262, %v3211, 0
        %v3282 = vsel %vm3262, %v3212, 0
        %v3285 = vsel %vm3262, %v3213, 0
        %v3288 = vsel %vm3262, %v3214, 0
        %v3291 = vsel %vm3262, %v3215, 0
        %v3294 = vsel %vm3262, %v3216, 0
        %v3297 = vsel %vm3262, %v3217, 0
        %v3300 = vsel %vm3262, %v3218, 0
        %v3303 = vsel %vm3262, %v3219, 0
        %v3306 = vsel %vm3262, %v3220, 0
        %v3309 = vsel %vm3262, %v3221, 0
        %vm3311 = vcmask 1043456
        %v3313 = vsel %vm3311, %v3257, 0
        %3315 = vmatpush.bf16.msra.mxu0 0
        %3316 = vmatpush.bf16.msra.mxu0 0
        %3317 = vmatpush.bf16.msra.mxu0 0
        %3318 = vmatpush.bf16.msra.mxu0 %v3313
        %3319 = vmatpush.bf16.msra.mxu0 %v3256
        %3320 = vmatpush.bf16.msra.mxu0 %v3255
        %3321 = vmatpush.bf16.msra.mxu0 %v3254
        %3322 = vmatpush.bf16.msra.mxu0 %v3253
        %3323 = vmatmul.bf16.gmra.mxu0 %v3264
        %v3324 = vpop.f32.mrf.mxu0
        %v3325 = vadd.f32 %v3233, %v3324
        %v3326 = vpop.f32.mrf.mxu0
        %v3327 = vadd.f32 %v3233, %v3326
        %3328 = vmatmul.bf16.gmra.mxu0 %v3267
        %v3329 = vpop.f32.mrf.mxu0
        %v3330 = vadd.f32 %v3233, %v3329
        %v3331 = vpop.f32.mrf.mxu0
        %v3332 = vadd.f32 %v3233, %v3331
        %3333 = vmatmul.bf16.gmra.mxu0 %v3270
        %v3334 = vpop.f32.mrf.mxu0
        %v3335 = vadd.f32 %v3233, %v3334
        %v3336 = vpop.f32.mrf.mxu0
        %v3337 = vadd.f32 %v3233, %v3336
        %3338 = vmatmul.bf16.gmra.mxu0 %v3273
        %v3339 = vpop.f32.mrf.mxu0
        %v3340 = vadd.f32 %v3233, %v3339
        %v3341 = vpop.f32.mrf.mxu0
        %v3342 = vadd.f32 %v3233, %v3341
        %3343 = vmatmul.bf16.gmra.mxu0 %v3276
        %v3344 = vpop.f32.mrf.mxu0
        %v3345 = vadd.f32 %v3233, %v3344
        %v3346 = vpop.f32.mrf.mxu0
        %v3347 = vadd.f32 %v3233, %v3346
        %3348 = vmatmul.bf16.gmra.mxu0 %v3279
        %v3349 = vpop.f32.mrf.mxu0
        %v3350 = vadd.f32 %v3233, %v3349
        %v3351 = vpop.f32.mrf.mxu0
        %v3352 = vadd.f32 %v3233, %v3351
        %3353 = vmatmul.bf16.gmra.mxu0 %v3282
        %v3354 = vpop.f32.mrf.mxu0
        %v3355 = vadd.f32 %v3233, %v3354
        %v3356 = vpop.f32.mrf.mxu0
        %v3357 = vadd.f32 %v3233, %v3356
        %3358 = vmatmul.bf16.gmra.mxu0 %v3285
        %v3359 = vpop.f32.mrf.mxu0
        %v3360 = vadd.f32 %v3233, %v3359
        %v3361 = vpop.f32.mrf.mxu0
        %v3362 = vadd.f32 %v3233, %v3361
        %3363 = vmatmul.bf16.gmra.mxu0 %v3288
        %v3364 = vpop.f32.mrf.mxu0
        %v3365 = vadd.f32 %v3233, %v3364
        %v3366 = vpop.f32.mrf.mxu0
        %v3367 = vadd.f32 %v3233, %v3366
        %3368 = vmatmul.bf16.gmra.mxu0 %v3291
        %v3369 = vpop.f32.mrf.mxu0
        %v3370 = vadd.f32 %v3233, %v3369
        %v3371 = vpop.f32.mrf.mxu0
        %v3372 = vadd.f32 %v3233, %v3371
        %3373 = vmatmul.bf16.gmra.mxu0 %v3294
        %v3374 = vpop.f32.mrf.mxu0
        %v3375 = vadd.f32 %v3233, %v3374
        %v3376 = vpop.f32.mrf.mxu0
        %v3377 = vadd.f32 %v3233, %v3376
        %3378 = vmatmul.bf16.gmra.mxu0 %v3297
        %v3379 = vpop.f32.mrf.mxu0
        %v3380 = vadd.f32 %v3233, %v3379
        %v3381 = vpop.f32.mrf.mxu0
        %v3382 = vadd.f32 %v3233, %v3381
        %3383 = vmatmul.bf16.gmra.mxu0 %v3300
        %v3384 = vpop.f32.mrf.mxu0
        %v3385 = vadd.f32 %v3233, %v3384
        %v3386 = vpop.f32.mrf.mxu0
        %v3387 = vadd.f32 %v3233, %v3386
        %3388 = vmatmul.bf16.gmra.mxu0 %v3303
        %v3389 = vpop.f32.mrf.mxu0
        %v3390 = vadd.f32 %v3233, %v3389
        %v3391 = vpop.f32.mrf.mxu0
        %v3392 = vadd.f32 %v3233, %v3391
        %3393 = vmatmul.bf16.gmra.mxu0 %v3306
        %v3394 = vpop.f32.mrf.mxu0
        %v3395 = vadd.f32 %v3233, %v3394
        %v3396 = vpop.f32.mrf.mxu0
        %v3397 = vadd.f32 %v3233, %v3396
        %3398 = vmatmul.bf16.gmra.mxu0 %v3309
        %v3399 = vpop.f32.mrf.mxu0
        %v3400 = vadd.f32 %v3233, %v3399
        %v3401 = vpop.f32.mrf.mxu0
        %v3402 = vadd.f32 %v3233, %v3401
        %3403 = vdwg.mxu0
        %v3404 = vmax.f32 %v3325, 0.0
        %v3405 = vmax.f32 %v3327, 0.0
        %v3406 = vmax.f32 %v3330, 0.0
        %v3407 = vmax.f32 %v3332, 0.0
        %v3408 = vmax.f32 %v3335, 0.0
        %v3409 = vmax.f32 %v3337, 0.0
        %v3410 = vmax.f32 %v3340, 0.0
        %v3411 = vmax.f32 %v3342, 0.0
        %v3412 = vmax.f32 %v3345, 0.0
        %v3413 = vmax.f32 %v3347, 0.0
        %v3414 = vmax.f32 %v3350, 0.0
        %v3415 = vmax.f32 %v3352, 0.0
        %v3416 = vmax.f32 %v3355, 0.0
        %v3417 = vmax.f32 %v3357, 0.0
        %v3418 = vmax.f32 %v3360, 0.0
        %v3419 = vmax.f32 %v3362, 0.0
        %v3420 = vmax.f32 %v3365, 0.0
        %v3421 = vmax.f32 %v3367, 0.0
        %v3422 = vmax.f32 %v3370, 0.0
        %v3423 = vmax.f32 %v3372, 0.0
        %v3424 = vmax.f32 %v3375, 0.0
        %v3425 = vmax.f32 %v3377, 0.0
        %v3426 = vmax.f32 %v3380, 0.0
        %v3427 = vmax.f32 %v3382, 0.0
        %v3428 = vmax.f32 %v3385, 0.0
        %v3429 = vmax.f32 %v3387, 0.0
        %v3430 = vmax.f32 %v3390, 0.0
        %v3431 = vmax.f32 %v3392, 0.0
        %v3432 = vmax.f32 %v3395, 0.0
        %v3433 = vmax.f32 %v3397, 0.0
        %v3434 = vmax.f32 %v3400, 0.0
        %v3435 = vmax.f32 %v3402, 0.0
        %v3436 = vmax.f32 %v3404, %v3406
        %v3437 = vmax.f32 %v3405, %v3407
        %v3438 = vmax.f32 %v3408, %v3410
        %v3439 = vmax.f32 %v3409, %v3411
        %v3440 = vmax.f32 %v3412, %v3414
        %v3441 = vmax.f32 %v3413, %v3415
        %v3442 = vmax.f32 %v3416, %v3418
        %v3443 = vmax.f32 %v3417, %v3419
        %v3444 = vmax.f32 %v3420, %v3422
        %v3445 = vmax.f32 %v3421, %v3423
        %v3446 = vmax.f32 %v3424, %v3426
        %v3447 = vmax.f32 %v3425, %v3427
        %v3448 = vmax.f32 %v3428, %v3430
        %v3449 = vmax.f32 %v3429, %v3431
        %v3450 = vmax.f32 %v3432, %v3434
        %v3451 = vmax.f32 %v3433, %v3435
        %v3460 = vrot.slane %v3436, 1
        %v3461 = vrot.slane %v3438, 1
        %v3462 = vrot.slane %v3440, 1
        %v3463 = vrot.slane %v3442, 1
        %v3464 = vrot.slane %v3444, 1
        %v3465 = vrot.slane %v3446, 1
        %v3466 = vrot.slane %v3448, 1
        %v3467 = vrot.slane %v3450, 1
        %v3476 = vmax.f32 %v3436, %v3460
        %v3477 = vmax.f32 %v3438, %v3461
        %v3478 = vmax.f32 %v3440, %v3462
        %v3479 = vmax.f32 %v3442, %v3463
        %v3480 = vmax.f32 %v3444, %v3464
        %v3481 = vmax.f32 %v3446, %v3465
        %v3482 = vmax.f32 %v3448, %v3466
        %v3483 = vmax.f32 %v3450, %v3467
        %v3492 = vrot.slane %v3437, 1
        %v3493 = vrot.slane %v3439, 1
        %v3494 = vrot.slane %v3441, 1
        %v3495 = vrot.slane %v3443, 1
        %v3496 = vrot.slane %v3445, 1
        %v3497 = vrot.slane %v3447, 1
        %v3498 = vrot.slane %v3449, 1
        %v3499 = vrot.slane %v3451, 1
        %v3508 = vmax.f32 %v3437, %v3492
        %v3509 = vmax.f32 %v3439, %v3493
        %v3510 = vmax.f32 %v3441, %v3494
        %v3511 = vmax.f32 %v3443, %v3495
        %v3512 = vmax.f32 %v3445, %v3496
        %v3513 = vmax.f32 %v3447, %v3497
        %v3514 = vmax.f32 %v3449, %v3498
        %v3515 = vmax.f32 %v3451, %v3499
        %v3524 = vrot.slane %v3476, 1
        %v3525 = vrot.slane %v3477, 1
        %v3526 = vrot.slane %v3478, 1
        %v3527 = vrot.slane %v3479, 1
        %v3528 = vrot.slane %v3480, 1
        %v3529 = vrot.slane %v3481, 1
        %v3530 = vrot.slane %v3482, 1
        %v3531 = vrot.slane %v3483, 1
        %v3540 = vrot.slane %v3476, 2
        %v3541 = vrot.slane %v3477, 2
        %v3542 = vrot.slane %v3478, 2
        %v3543 = vrot.slane %v3479, 2
        %v3544 = vrot.slane %v3480, 2
        %v3545 = vrot.slane %v3481, 2
        %v3546 = vrot.slane %v3482, 2
        %v3547 = vrot.slane %v3483, 2
        %v3556 = vrot.slane %v3476, 3
        %v3557 = vrot.slane %v3477, 3
        %v3558 = vrot.slane %v3478, 3
        %v3559 = vrot.slane %v3479, 3
        %v3560 = vrot.slane %v3480, 3
        %v3561 = vrot.slane %v3481, 3
        %v3562 = vrot.slane %v3482, 3
        %v3563 = vrot.slane %v3483, 3
        %v3580 = vrot.slane %v3508, 4
        %v3581 = vrot.slane %v3509, 4
        %v3582 = vrot.slane %v3510, 4
        %v3583 = vrot.slane %v3511, 4
        %v3584 = vrot.slane %v3512, 4
        %v3585 = vrot.slane %v3513, 4
        %v3586 = vrot.slane %v3514, 4
        %v3587 = vrot.slane %v3515, 4
        %v3596 = vrot.slane %v3508, 5
        %v3597 = vrot.slane %v3509, 5
        %v3598 = vrot.slane %v3510, 5
        %v3599 = vrot.slane %v3511, 5
        %v3600 = vrot.slane %v3512, 5
        %v3601 = vrot.slane %v3513, 5
        %v3602 = vrot.slane %v3514, 5
        %v3603 = vrot.slane %v3515, 5
        %v3612 = vrot.slane %v3508, 6
        %v3613 = vrot.slane %v3509, 6
        %v3614 = vrot.slane %v3510, 6
        %v3615 = vrot.slane %v3511, 6
        %v3616 = vrot.slane %v3512, 6
        %v3617 = vrot.slane %v3513, 6
        %v3618 = vrot.slane %v3514, 6
        %v3619 = vrot.slane %v3515, 6
        %v3628 = vrot.slane %v3508, 7
        %v3629 = vrot.slane %v3509, 7
        %v3630 = vrot.slane %v3510, 7
        %v3631 = vrot.slane %v3511, 7
        %v3632 = vrot.slane %v3512, 7
        %v3633 = vrot.slane %v3513, 7
        %v3634 = vrot.slane %v3514, 7
        %v3635 = vrot.slane %v3515, 7
        %v3644 = vsel %vm288, %v3476, %v3524
        %v3645 = vsel %vm288, %v3477, %v3525
        %v3646 = vsel %vm288, %v3478, %v3526
        %v3647 = vsel %vm288, %v3479, %v3527
        %v3648 = vsel %vm288, %v3480, %v3528
        %v3649 = vsel %vm288, %v3481, %v3529
        %v3650 = vsel %vm288, %v3482, %v3530
        %v3651 = vsel %vm288, %v3483, %v3531
        %v3652 = vsel %vm1719, %v3644, %v3540
        %v3653 = vsel %vm1719, %v3645, %v3541
        %v3654 = vsel %vm1719, %v3646, %v3542
        %v3655 = vsel %vm1719, %v3647, %v3543
        %v3656 = vsel %vm1719, %v3648, %v3544
        %v3657 = vsel %vm1719, %v3649, %v3545
        %v3658 = vsel %vm1719, %v3650, %v3546
        %v3659 = vsel %vm1719, %v3651, %v3547
        %vm3660 = vcmask 1042432
        %v3661 = vsel %vm3660, %v3652, %v3556
        %v3662 = vsel %vm3660, %v3653, %v3557
        %v3663 = vsel %vm3660, %v3654, %v3558
        %v3664 = vsel %vm3660, %v3655, %v3559
        %v3665 = vsel %vm3660, %v3656, %v3560
        %v3666 = vsel %vm3660, %v3657, %v3561
        %v3667 = vsel %vm3660, %v3658, %v3562
        %v3668 = vsel %vm3660, %v3659, %v3563
        %v3669 = vsel %vm3311, %v3661, %v3580
        %v3670 = vsel %vm3311, %v3662, %v3581
        %v3671 = vsel %vm3311, %v3663, %v3582
        %v3672 = vsel %vm3311, %v3664, %v3583
        %v3673 = vsel %vm3311, %v3665, %v3584
        %v3674 = vsel %vm3311, %v3666, %v3585
        %v3675 = vsel %vm3311, %v3667, %v3586
        %v3676 = vsel %vm3311, %v3668, %v3587
        %vm3677 = vcmask 1044480
        %v3678 = vsel %vm3677, %v3669, %v3596
        %v3679 = vsel %vm3677, %v3670, %v3597
        %v3680 = vsel %vm3677, %v3671, %v3598
        %v3681 = vsel %vm3677, %v3672, %v3599
        %v3682 = vsel %vm3677, %v3673, %v3600
        %v3683 = vsel %vm3677, %v3674, %v3601
        %v3684 = vsel %vm3677, %v3675, %v3602
        %v3685 = vsel %vm3677, %v3676, %v3603
        %v3686 = vsel %vm618, %v3678, %v3612
        %v3687 = vsel %vm618, %v3679, %v3613
        %v3688 = vsel %vm618, %v3680, %v3614
        %v3689 = vsel %vm618, %v3681, %v3615
        %v3690 = vsel %vm618, %v3682, %v3616
        %v3691 = vsel %vm618, %v3683, %v3617
        %v3692 = vsel %vm618, %v3684, %v3618
        %v3693 = vsel %vm618, %v3685, %v3619
        %v3694 = vsel %vm447, %v3686, %v3628
        %v3695 = vsel %vm447, %v3687, %v3629
        %v3696 = vsel %vm447, %v3688, %v3630
        %v3697 = vsel %vm447, %v3689, %v3631
        %v3698 = vsel %vm447, %v3690, %v3632
        %v3699 = vsel %vm447, %v3691, %v3633
        %v3700 = vsel %vm447, %v3692, %v3634
        %v3701 = vsel %vm447, %v3693, %v3635
        %3702 = vst.msk [vmem:[%s217] sm:$0xff] %vm1400, %v3694
        %3703 = vst.msk [vmem:[%s217 + $0x8] sm:$0xff] %vm1400, %v3695
        %3704 = vst.msk [vmem:[%s217 + $0x10] sm:$0xff] %vm1400, %v3696
        %3705 = vst.msk [vmem:[%s217 + $0x18] sm:$0xff] %vm1400, %v3697
        %3706 = vst.msk [vmem:[%s217 + $0x20] sm:$0xff] %vm1400, %v3698
        %3707 = vst.msk [vmem:[%s217 + $0x28] sm:$0xff] %vm1400, %v3699
        %3708 = vst.msk [vmem:[%s217 + $0x30] sm:$0xff] %vm1400, %v3700
        %3709 = vst.msk [vmem:[%s217 + $0x38] sm:$0xff] %vm1400, %v3701
        %s3710 = sand.u32 %s137, 1
        %s3711 = scalar_lea.sflag [#allocation3], %s3710
        %s3712 = sand.u32 %s137, 1
        %s3713 = smul.addr %s3712, 64
        %s3714 = scalar_lea.vmem [#allocation2], %s3713
        // Predicated region
        $region41: #{tpu_custom_call.1} parent=39 // pred_check
          %p3715 = pneg %p147
        $region42: #{tpu_custom_call.1} parent=39 // pred_check_branch
          %3717 = sbr.rel (%p3715) target = $region44
        $region43: #{tpu_custom_call.1} parent=39 // pred_region
          %3719 = vsyncadd %s3711, 0
          %s3720 = smul.addr %s19, 8
          %s3721 = smul.addr %s3720, 8
          %s3722 = scalar_lea.hbm %s5, %s3721
          %s3723 = sshll.u32 %s3714, 4
          %s3724 = int_to_ptr.vmem [resolvable:$true] %s3723
          %s3725 = sshll.u32 %s3722, 4
          %s3726 = int_to_ptr.hbm [resolvable:$true] %s3725
          %3731 = dma.vmem_to_hbm [thread:$0]  %s3724, 1024, %s3726, %s3711, 128, 128, 8
        $region44: #{tpu_custom_call.1} parent=39 // pred_fallthru
          _
      $region40: #{tpu_custom_call.1} parent=5 // pred_fallthru
        _
      %p3732 = scmp.le.s32.totalorder 2, %s14
      // Predicated region
      $region45: #{tpu_custom_call.1} parent=5 // pred_check
        %p3733 = pneg %p3732
      $region46: #{tpu_custom_call.1} parent=5 // pred_check_branch
        %3735 = sbr.rel (%p3733) target = $region48
      $region47: #{tpu_custom_call.1} parent=5 // pred_region
        %s3736 = ssub.s32 %s14, 2
        // Predicated region
        $region49: #{tpu_custom_call.1} parent=47 // pred_check
          %p3737 = pneg %p153
        $region50: #{tpu_custom_call.1} parent=47 // pred_check_branch
          %3739 = sbr.rel (%p3737) target = $region52
        $region51: #{tpu_custom_call.1} parent=47 // pred_region
          %s3740 = sand.u32 %s138, 1
          %s3741 = scalar_lea.sflag [#allocation3], %s3740
          %s3742 = sand.u32 %s138, 1
          %s3743 = smul.addr %s3742, 64
          %s3744 = scalar_lea.vmem [#allocation2], %s3743
          %3746 = dma.done %s3741, 1024
        $region52: #{tpu_custom_call.1} parent=47 // pred_fallthru
          _
      $region48: #{tpu_custom_call.1} parent=5 // pred_fallthru
        _
    $region6: #{tpu_custom_call.1} parent=1 // loop_footer
      %s18 = sadd.s32 1, %s14
    $region7: #{tpu_custom_call.1} parent=1 // loop_footer_branch
      %13 = sbr.rel target = $region3
    $region8: #{tpu_custom_call.1} parent=1 // loop_exit
      _
    %3747 = vsyncpa [#allocation3], 1
    %s3748 = scalar_lea.sflag [#allocation3], 1
    %3749 = vsyncpa %s3748, 1

</llo_original>
